<compile_context>
chip_gen: v6e
topology: v6e:2x2x1
jax: 0.10.0
libtpu: 0.0.40
codegen_flags: <defaults>
</compile_context>

<pallas_src>
import math
import numpy as np
import jax
import jax.numpy as jnp
from jax.experimental import pallas as pl
from jax.experimental.pallas import tpu as pltpu


# ------------------------------------------------------------------ helpers
def pool_per_T(T, L):
    if T >= 512:
        pool_num = 4
    elif T >= 256:
        pool_num = 3
    elif T >= 128:
        pool_num = 2
    elif T >= 64:
        pool_num = 1
    else:
        return []
    split = [int(np.floor(L / (pool_num + 1))) for _ in range(pool_num + 1)]
    residual = L - sum(split)
    for i in range(residual):
        split[i] += 1
    split.pop()
    pool_idx = []
    pidx = -1
    for i in split:
        pidx += i
        pool_idx.append(pidx)
    return pool_idx


def _shuffle_perm(C, L):
    # channel_shuffle: shuffled[i] = x[perm[i]]
    return np.arange(C).reshape(L, C // L).T.reshape(-1)


# ------------------------------------------------------------------ fused kernel
def _make_calanet_kernel(cin_pad, T, TB, K, L, Tp, Cout, O, ncls):
    f32 = jnp.float32
    bf16 = jnp.bfloat16
    N = T * TB                 # stem / pool width (lane axis)
    Np = Tp * TB               # post-pool width (lane axis)
    padl = (K - 1) // 2
    Wy = (Tp + K - 1) * TB     # padded activation width
    NEG = float(jnp.finfo(jnp.float32).min)

    def kernel(x_ref, sw_ref, sb_ref, gw_ref, gs_ref, tgv_ref, tgb_ref,
               fcw_ref, fcb_ref, out_ref, spad_ref, ypad_ref, feat_ref):
        # ---- stem Conv1d(Cin -> C0, K, 'same') as one im2col matmul -------
        # x is host-padded in time, columns are time-major (t*TB + b).
        patches = jnp.concatenate(
            [x_ref[0, :, pl.ds(k * TB, N)] for k in range(K)], axis=0)       # (K*Cin_pad, N) bf16
        s = jnp.dot(sw_ref[...], patches,
                    preferred_element_type=f32) + sb_ref[...]                # (Cout, N) f32

        # ---- MaxPool1d(kernel=3, stride=2, padding=1) ----------------------
        neg = jnp.full((Cout, TB), NEG, f32)
        spad_ref[:, pl.ds(0, TB)] = neg
        spad_ref[:, pl.ds((T + 1) * TB, TB)] = neg
        spad_ref[:, pl.ds(TB, N)] = s

        # zero the conv halo of the layer activation buffer once per tile
        ypad_ref[...] = jnp.zeros((Cout, Wy), bf16)
        for t in range(Tp):
            c = 2 * t * TB
            blk = jnp.maximum(
                jnp.maximum(spad_ref[:, pl.ds(c, TB)],
                            spad_ref[:, pl.ds(c + TB, TB)]),
                spad_ref[:, pl.ds(c + 2 * TB, TB)])                          # (Cout, TB)
            ypad_ref[:, pl.ds((padl + t) * TB, TB)] = blk.astype(bf16)

        # ---- L x CALABlock: gconv (+folded BN) + ReLU, tgconv (+folded shuffle)
        def block(l, carry):
            # grouped conv (densified) as one im2col matmul
            gp = jnp.concatenate(
                [ypad_ref[:, pl.ds(k * TB, Np)] for k in range(K)], axis=0)  # (K*Cout, Np) bf16
            z = jnp.dot(gw_ref[l], gp,
                        preferred_element_type=f32) + gs_ref[l]              # (Cout, Np) f32
            z = jnp.maximum(z, 0.0)
            # feed next block (channel_shuffle folded into next gconv weights)
            ypad_ref[:, pl.ds(padl * TB, Np)] = z.astype(bf16)

            # tgconv (kernel_size == Tp): one MXU matmul over the (t, c) pairs
            zs = jnp.concatenate(
                [ypad_ref[:, pl.ds((padl + t) * TB, TB)] for t in range(Tp)],
                axis=0)                                                      # (Tp*Cout, TB) bf16
            g = jnp.dot(tgv_ref[l], zs,
                        preferred_element_type=f32) + tgb_ref[l]             # (O, TB) f32
            g = jnp.maximum(g, 0.0)
            feat_ref[pl.ds(pl.multiple_of(l * O, O), O), :] = g
            return carry

        _ = jax.lax.fori_loop(0, L, block, 0)

        # ---- FC + log_softmax (classes on sublanes, batch on lanes) --------
        feats = feat_ref[...].astype(bf16)                                   # (L*O, TB)
        logits = jnp.dot(fcw_ref[...], feats,
                         preferred_element_type=f32) + fcb_ref[...]          # (ncls, TB)
        m = jnp.max(logits, axis=0, keepdims=True)
        lse = m + jnp.log(jnp.sum(jnp.exp(logits - m), axis=0, keepdims=True))
        out_ref[0] = logits - lse

    return kernel


# ------------------------------------------------------------------ model build
def build_calanet(key, nc_input, n_classes, segment_size, L):
    T = segment_size
    nc_o = 64
    if nc_input > 64:
        nc_o *= 2

    K = 5
    eps = 1e-5
    cin_pad = ((nc_input + 7) // 8) * 8

    keys = jax.random.split(key, 4 + 7 * L)
    ki = 0

    def nrm(shape, scale=0.1):
        nonlocal ki
        v = scale * jax.random.normal(keys[ki], shape, dtype=jnp.float32)
        ki += 1
        return v

    def pos(shape):
        nonlocal ki
        v = 0.5 + jax.random.uniform(keys[ki], shape, dtype=jnp.float32)
        ki += 1
        return v

    stem_w = nrm((nc_o, nc_input, K))
    stem_b = nrm((nc_o,))
    # im2col layout: column index = k*Cin_pad + c (channel-padded to sublane x8)
    swd = jnp.transpose(stem_w, (0, 2, 1))                       # (C0, K, Cin)
    swd = jnp.pad(swd, ((0, 0), (0, 0), (0, cin_pad - nc_input)))
    stem_wd = swd.reshape(nc_o, K * cin_pad)

    pool_idx = pool_per_T(T, L)
    Tp = math.ceil(T / 2)
    nc_i = nc_o

    gwd_list, gshift_list, tgv_list, tgb_list = [], [], [], []
    out_channel_num = []
    for i in range(L):
        if i in pool_idx:
            # TODO(synk): pooled CALABlock (adaptive_max_pool1d + channel growth),
            # only triggered for segment_size >= 64, is not implemented.
            raise NotImplementedError("pooled CALABlock not implemented")

        IpG = nc_i // L
        OpG = nc_o // L

        gconv_w = nrm((nc_o, IpG, K))          # grouped Conv1d weight (no bias)
        gamma = pos((nc_o,))
        beta = nrm((nc_o,))
        rmean = nrm((nc_o,))
        rvar = pos((nc_o,))
        tg_w = nrm((OpG, nc_o, Tp))
        tg_b = nrm((OpG,))

        scale = gamma / jnp.sqrt(rvar + eps)
        shift = beta - rmean * scale

        inv_in = np.argsort(_shuffle_perm(nc_i, L))    # previous block's shuffle
        inv_out = np.argsort(_shuffle_perm(nc_o, L))   # this block's shuffle

        # densify grouped conv -> (Cout, K, Cin) block-structured weight
        # TODO(synk): keep group structure instead of densifying once MXU-bound.
        w3 = jnp.transpose(gconv_w, (0, 2, 1))         # (Cout, K, IpG)
        blocks = []
        for g in range(L):
            pad_before = g * IpG
            pad_after = nc_i - (g + 1) * IpG
            blocks.append(jnp.pad(w3[g * OpG:(g + 1) * OpG],
                                  ((0, 0), (0, 0), (pad_before, pad_after))))
        wd = jnp.concatenate(blocks, axis=0)           # (Cout, K, Cin)
        wd = wd * scale[:, None, None]                 # fold BatchNorm scale
        if i > 0:
            wd = wd[:, :, inv_in]                      # fold previous channel_shuffle
        gwd_list.append(wd.reshape(nc_o, K * nc_i))
        gshift_list.append(shift.reshape(nc_o, 1))     # folded BatchNorm shift

        # fold this block's channel_shuffle into tgconv; matrix layout for the
        # in-kernel matmul: column index = t*Cout + c
        vm = tg_w[:, inv_out, :]                       # (OpG, Cout, Tp)
        vm = jnp.transpose(vm, (0, 2, 1)).reshape(OpG, Tp * nc_o)
        tgv_list.append(vm)
        tgb_list.append(tg_b.reshape(OpG, 1))

        nc_i = nc_o
        out_channel_num.append(OpG)

    fc_w = nrm((n_classes, sum(out_channel_num)))
    fc_b = nrm((n_classes,))

    bf16 = jnp.bfloat16
    return dict(
        stem_wd=stem_wd.astype(bf16),                  # (C0, K*Cin_pad)
        stem_b=stem_b.reshape(nc_o, 1),                # (C0, 1) f32
        gwd=jnp.stack(gwd_list).astype(bf16),          # (L, Cout, K*Cin)
        gshift=jnp.stack(gshift_list),                 # (L, Cout, 1) f32
        tgv=jnp.stack(tgv_list).astype(bf16),          # (L, OpG, Tp*Cout)
        tgb=jnp.stack(tgb_list),                       # (L, OpG, 1) f32
        fc_w=fc_w.astype(bf16),                        # (ncls, L*OpG)
        fc_b=fc_b.reshape(n_classes, 1),               # (ncls, 1) f32
    )


# ------------------------------------------------------------------ forward
def calanet_forward(params, x):
    B, Cin, T = x.shape
    bf16 = jnp.bfloat16

    cin_pad = ((Cin + 7) // 8) * 8
    K = params["stem_wd"].shape[1] // cin_pad
    C0 = params["stem_wd"].shape[0]
    L, Cout, _ = params["gwd"].shape
    O = params["tgv"].shape[1]
    Tp = params["tgv"].shape[2] // Cout
    ncls = params["fc_w"].shape[0]
    assert C0 == Cout
    assert Tp == (T - 1) // 2 + 1

    padl = (K - 1) // 2
    padr = K - 1 - padl

    # batch tile: TB samples share the lane axis (TB=128 for big batches)
    TB = min(B, 128)
    while B % TB != 0:
        TB -= 1
    nt = B // TB
    Wstem = (T + K - 1) * TB

    # host layout: (nt, Cin_pad, (T+K-1)*TB), time-major columns (t*TB + b),
    # channels zero-padded to a sublane multiple, time pre-padded for the stem halo
    xg = x.reshape(nt, TB, Cin, T)
    xg = jnp.pad(xg, ((0, 0), (0, 0), (0, cin_pad - Cin), (padl, padr)))
    xg = jnp.transpose(xg, (0, 2, 3, 1)).reshape(nt, cin_pad, Wstem).astype(bf16)

    kernel = _make_calanet_kernel(cin_pad, T, TB, K, L, Tp, Cout, O, ncls)

    out = pl.pallas_call(
        kernel,
        out_shape=jax.ShapeDtypeStruct((nt, ncls, TB), jnp.float32),
        grid=(nt,),
        in_specs=[
            pl.BlockSpec((1, cin_pad, Wstem), lambda g: (g, 0, 0)),
            pl.BlockSpec(params["stem_wd"].shape, lambda g: (0, 0)),
            pl.BlockSpec(params["stem_b"].shape, lambda g: (0, 0)),
            pl.BlockSpec(params["gwd"].shape, lambda g: (0, 0, 0)),
            pl.BlockSpec(params["gshift"].shape, lambda g: (0, 0, 0)),
            pl.BlockSpec(params["tgv"].shape, lambda g: (0, 0, 0)),
            pl.BlockSpec(params["tgb"].shape, lambda g: (0, 0, 0)),
            pl.BlockSpec(params["fc_w"].shape, lambda g: (0, 0)),
            pl.BlockSpec(params["fc_b"].shape, lambda g: (0, 0)),
        ],
        out_specs=pl.BlockSpec((1, ncls, TB), lambda g: (g, 0, 0)),
        scratch_shapes=[
            pltpu.VMEM((Cout, (T + 2) * TB), jnp.float32),        # maxpool -inf-padded stem output
            pltpu.VMEM((Cout, (Tp + K - 1) * TB), jnp.bfloat16),  # conv-halo padded activations
            pltpu.VMEM((L * O, TB), jnp.float32),                 # concatenated global features
        ],
        compiler_params=pltpu.CompilerParams(dimension_semantics=("parallel",)),
    )(xg, params["stem_wd"], params["stem_b"], params["gwd"], params["gshift"],
      params["tgv"], params["tgb"], params["fc_w"], params["fc_b"])

    # (nt, ncls, TB) -> (B, ncls)
    return jnp.transpose(out, (0, 2, 1)).reshape(B, ncls)


# ------------------------------------------------------------------ main
if __name__ == "__main__":
    B, nc_input, segment_size, L, n_classes = 2, 4, 16, 4, 6
    key = jax.random.PRNGKey(0)
    pkey, xkey = jax.random.split(key)
    params = build_calanet(pkey, nc_input, n_classes, segment_size, L)
    x = jax.random.normal(xkey, (B, nc_input, segment_size), dtype=jnp.float32)

    out = jax.jit(calanet_forward)(params, x)
    out = jax.block_until_ready(out)

    assert out.shape == (B, n_classes)
    assert bool(jnp.all(jnp.isfinite(out)))
    # log_softmax rows must exponentiate to probability distributions
    assert bool(jnp.all(jnp.abs(jnp.sum(jnp.exp(out), axis=1) - 1.0) < 1e-3))
    print("KERNEL_OK")
</pallas_src>

<mosaic_0001>
module attributes {stable_mosaic.version = 11 : i64} {
  func.func @kernel(%arg0: i32, %arg1: memref<1x8x40xbf16, #tpu.memory_space<vmem>>, %arg2: memref<64x40xbf16, #tpu.memory_space<vmem>>, %arg3: memref<64x1xf32, #tpu.memory_space<vmem>>, %arg4: memref<4x64x320xbf16, #tpu.memory_space<vmem>>, %arg5: memref<4x64x1xf32, #tpu.memory_space<vmem>>, %arg6: memref<4x16x512xbf16, #tpu.memory_space<vmem>>, %arg7: memref<4x16x1xf32, #tpu.memory_space<vmem>>, %arg8: memref<6x64xbf16, #tpu.memory_space<vmem>>, %arg9: memref<6x1xf32, #tpu.memory_space<vmem>>, %arg10: memref<1x6x2xf32, #tpu.memory_space<vmem>>, %arg11: memref<64x36xf32, #tpu.memory_space<vmem>>, %arg12: memref<64x24xbf16, #tpu.memory_space<vmem>>, %arg13: memref<64x2xf32, #tpu.memory_space<vmem>>) attributes {dimension_semantics = [#tpu.dimension_semantics<parallel>], iteration_bounds = array<i64: 1>, scalar_prefetch = 0 : i64, scratch_operands = 3 : i64, tpu.core_type = #tpu.core_type<tc>, window_params = [{transform_indices = @transform_0, window_bounds = array<i64: 1, 8, 40>}, {pipeline_mode = #tpu.pipeline_mode<synchronous>, transform_indices = @transform_1, window_bounds = array<i64: 64, 40>}, {pipeline_mode = #tpu.pipeline_mode<synchronous>, transform_indices = @transform_2, window_bounds = array<i64: 64, 1>}, {pipeline_mode = #tpu.pipeline_mode<synchronous>, transform_indices = @transform_3, window_bounds = array<i64: 4, 64, 320>}, {pipeline_mode = #tpu.pipeline_mode<synchronous>, transform_indices = @transform_4, window_bounds = array<i64: 4, 64, 1>}, {pipeline_mode = #tpu.pipeline_mode<synchronous>, transform_indices = @transform_5, window_bounds = array<i64: 4, 16, 512>}, {pipeline_mode = #tpu.pipeline_mode<synchronous>, transform_indices = @transform_6, window_bounds = array<i64: 4, 16, 1>}, {pipeline_mode = #tpu.pipeline_mode<synchronous>, transform_indices = @transform_7, window_bounds = array<i64: 6, 64>}, {pipeline_mode = #tpu.pipeline_mode<synchronous>, transform_indices = @transform_8, window_bounds = array<i64: 6, 1>}, {transform_indices = @transform_9, window_bounds = array<i64: 1, 6, 2>}]} {
    %c0 = arith.constant 0 : index
    %c0_0 = arith.constant 0 : index
    %c0_1 = arith.constant 0 : index
    %0 = vector.load %arg1[%c0, %c0_0, %c0_1] : memref<1x8x40xbf16, #tpu.memory_space<vmem>>, vector<1x8x32xbf16>
    %1 = vector.shape_cast %0 : vector<1x8x32xbf16> to vector<8x32xbf16>
    %c0_2 = arith.constant 0 : index
    %c0_3 = arith.constant 0 : index
    %c2 = arith.constant 2 : index
    %2 = vector.load %arg1[%c0_2, %c0_3, %c2] : memref<1x8x40xbf16, #tpu.memory_space<vmem>>, vector<1x8x32xbf16>
    %3 = vector.shape_cast %2 : vector<1x8x32xbf16> to vector<8x32xbf16>
    %c0_4 = arith.constant 0 : index
    %c0_5 = arith.constant 0 : index
    %c4 = arith.constant 4 : index
    %4 = vector.load %arg1[%c0_4, %c0_5, %c4] : memref<1x8x40xbf16, #tpu.memory_space<vmem>>, vector<1x8x32xbf16>
    %5 = vector.shape_cast %4 : vector<1x8x32xbf16> to vector<8x32xbf16>
    %c0_6 = arith.constant 0 : index
    %c0_7 = arith.constant 0 : index
    %c6 = arith.constant 6 : index
    %6 = vector.load %arg1[%c0_6, %c0_7, %c6] : memref<1x8x40xbf16, #tpu.memory_space<vmem>>, vector<1x8x32xbf16>
    %7 = vector.shape_cast %6 : vector<1x8x32xbf16> to vector<8x32xbf16>
    %c0_8 = arith.constant 0 : index
    %c0_9 = arith.constant 0 : index
    %c8 = arith.constant 8 : index
    %8 = vector.load %arg1[%c0_8, %c0_9, %c8] : memref<1x8x40xbf16, #tpu.memory_space<vmem>>, vector<1x8x32xbf16>
    %9 = vector.shape_cast %8 : vector<1x8x32xbf16> to vector<8x32xbf16>
    %10 = tpu.concatenate %1, %3, %5, %7, %9 in 0 : vector<8x32xbf16>, vector<8x32xbf16>, vector<8x32xbf16>, vector<8x32xbf16>, vector<8x32xbf16> -> vector<40x32xbf16>
    %c0_10 = arith.constant 0 : index
    %c0_11 = arith.constant 0 : index
    %11 = vector.load %arg2[%c0_10, %c0_11] : memref<64x40xbf16, #tpu.memory_space<vmem>>, vector<64x40xbf16>
    %cst = arith.constant dense<0.000000e+00> : vector<64x32xf32>
    %12 = tpu.matmul %11, %10, %cst {dimension_numbers = #tpu.dot_dimension_numbers<[1], [0], [0], [1], [0, 0, 1, 1], [], []>} : vector<64x40xbf16>, vector<40x32xbf16>, vector<64x32xf32> -> vector<64x32xf32>
    %c0_12 = arith.constant 0 : index
    %c0_13 = arith.constant 0 : index
    %13 = vector.load %arg3[%c0_12, %c0_13] : memref<64x1xf32, #tpu.memory_space<vmem>>, vector<64x1xf32>
    %14 = vector.broadcast %13 : vector<64x1xf32> to vector<64x32xf32>
    %15 = arith.addf %12, %14 : vector<64x32xf32>
    %cst_14 = arith.constant -3.40282347E+38 : f32
    %16 = vector.broadcast %cst_14 : f32 to vector<64x2xf32>
    %c0_15 = arith.constant 0 : index
    %c0_16 = arith.constant 0 : index
    %17 = vector.load %arg11[%c0_15, %c0_16] : memref<64x36xf32, #tpu.memory_space<vmem>>, vector<64x2xf32>
    tpu.vector_store %arg11[%c0_15, %c0_16], %16 {strides = array<i32>} : memref<64x36xf32, #tpu.memory_space<vmem>>, vector<64x2xf32>,
    %c0_17 = arith.constant 0 : index
    %c34 = arith.constant 34 : index
    %18 = vector.load %arg11[%c0_17, %c34] : memref<64x36xf32, #tpu.memory_space<vmem>>, vector<64x2xf32>
    tpu.vector_store %arg11[%c0_17, %c34], %16 {strides = array<i32>} : memref<64x36xf32, #tpu.memory_space<vmem>>, vector<64x2xf32>,
    %c0_18 = arith.constant 0 : index
    %c2_19 = arith.constant 2 : index
    %19 = vector.load %arg11[%c0_18, %c2_19] : memref<64x36xf32, #tpu.memory_space<vmem>>, vector<64x32xf32>
    tpu.vector_store %arg11[%c0_18, %c2_19], %15 {strides = array<i32>} : memref<64x36xf32, #tpu.memory_space<vmem>>, vector<64x32xf32>,
    %cst_20 = arith.constant 0.000000e+00 : bf16
    %20 = vector.broadcast %cst_20 : bf16 to vector<64x24xbf16>
    %c0_21 = arith.constant 0 : index
    %c0_22 = arith.constant 0 : index
    %21 = vector.load %arg12[%c0_21, %c0_22] : memref<64x24xbf16, #tpu.memory_space<vmem>>, vector<64x24xbf16>
    tpu.vector_store %arg12[%c0_21, %c0_22], %20 {strides = array<i32>} : memref<64x24xbf16, #tpu.memory_space<vmem>>, vector<64x24xbf16>,
    %c0_23 = arith.constant 0 : index
    %c0_24 = arith.constant 0 : index
    %22 = vector.load %arg11[%c0_23, %c0_24] : memref<64x36xf32, #tpu.memory_space<vmem>>, vector<64x2xf32>
    %c0_25 = arith.constant 0 : index
    %c2_26 = arith.constant 2 : index
    %23 = vector.load %arg11[%c0_25, %c2_26] : memref<64x36xf32, #tpu.memory_space<vmem>>, vector<64x2xf32>
    %24 = arith.maximumf %22, %23 : vector<64x2xf32>
    %c0_27 = arith.constant 0 : index
    %c4_28 = arith.constant 4 : index
    %25 = vector.load %arg11[%c0_27, %c4_28] : memref<64x36xf32, #tpu.memory_space<vmem>>, vector<64x2xf32>
    %26 = arith.maximumf %24, %25 : vector<64x2xf32>
    %27 = arith.truncf %26 : vector<64x2xf32> to vector<64x2xbf16>
    %c0_29 = arith.constant 0 : index
    %c4_30 = arith.constant 4 : index
    %28 = vector.load %arg12[%c0_29, %c4_30] : memref<64x24xbf16, #tpu.memory_space<vmem>>, vector<64x2xbf16>
    tpu.vector_store %arg12[%c0_29, %c4_30], %27 {strides = array<i32>} : memref<64x24xbf16, #tpu.memory_space<vmem>>, vector<64x2xbf16>,
    %c0_31 = arith.constant 0 : index
    %c4_32 = arith.constant 4 : index
    %29 = vector.load %arg11[%c0_31, %c4_32] : memref<64x36xf32, #tpu.memory_space<vmem>>, vector<64x2xf32>
    %c0_33 = arith.constant 0 : index
    %c6_34 = arith.constant 6 : index
    %30 = vector.load %arg11[%c0_33, %c6_34] : memref<64x36xf32, #tpu.memory_space<vmem>>, vector<64x2xf32>
    %31 = arith.maximumf %29, %30 : vector<64x2xf32>
    %c0_35 = arith.constant 0 : index
    %c8_36 = arith.constant 8 : index
    %32 = vector.load %arg11[%c0_35, %c8_36] : memref<64x36xf32, #tpu.memory_space<vmem>>, vector<64x2xf32>
    %33 = arith.maximumf %31, %32 : vector<64x2xf32>
    %34 = arith.truncf %33 : vector<64x2xf32> to vector<64x2xbf16>
    %c0_37 = arith.constant 0 : index
    %c6_38 = arith.constant 6 : index
    %35 = vector.load %arg12[%c0_37, %c6_38] : memref<64x24xbf16, #tpu.memory_space<vmem>>, vector<64x2xbf16>
    tpu.vector_store %arg12[%c0_37, %c6_38], %34 {strides = array<i32>} : memref<64x24xbf16, #tpu.memory_space<vmem>>, vector<64x2xbf16>,
    %c0_39 = arith.constant 0 : index
    %c8_40 = arith.constant 8 : index
    %36 = vector.load %arg11[%c0_39, %c8_40] : memref<64x36xf32, #tpu.memory_space<vmem>>, vector<64x2xf32>
    %c0_41 = arith.constant 0 : index
    %c10 = arith.constant 10 : index
    %37 = vector.load %arg11[%c0_41, %c10] : memref<64x36xf32, #tpu.memory_space<vmem>>, vector<64x2xf32>
    %38 = arith.maximumf %36, %37 : vector<64x2xf32>
    %c0_42 = arith.constant 0 : index
    %c12 = arith.constant 12 : index
    %39 = vector.load %arg11[%c0_42, %c12] : memref<64x36xf32, #tpu.memory_space<vmem>>, vector<64x2xf32>
    %40 = arith.maximumf %38, %39 : vector<64x2xf32>
    %41 = arith.truncf %40 : vector<64x2xf32> to vector<64x2xbf16>
    %c0_43 = arith.constant 0 : index
    %c8_44 = arith.constant 8 : index
    %42 = vector.load %arg12[%c0_43, %c8_44] : memref<64x24xbf16, #tpu.memory_space<vmem>>, vector<64x2xbf16>
    tpu.vector_store %arg12[%c0_43, %c8_44], %41 {strides = array<i32>} : memref<64x24xbf16, #tpu.memory_space<vmem>>, vector<64x2xbf16>,
    %c0_45 = arith.constant 0 : index
    %c12_46 = arith.constant 12 : index
    %43 = vector.load %arg11[%c0_45, %c12_46] : memref<64x36xf32, #tpu.memory_space<vmem>>, vector<64x2xf32>
    %c0_47 = arith.constant 0 : index
    %c14 = arith.constant 14 : index
    %44 = vector.load %arg11[%c0_47, %c14] : memref<64x36xf32, #tpu.memory_space<vmem>>, vector<64x2xf32>
    %45 = arith.maximumf %43, %44 : vector<64x2xf32>
    %c0_48 = arith.constant 0 : index
    %c16 = arith.constant 16 : index
    %46 = vector.load %arg11[%c0_48, %c16] : memref<64x36xf32, #tpu.memory_space<vmem>>, vector<64x2xf32>
    %47 = arith.maximumf %45, %46 : vector<64x2xf32>
    %48 = arith.truncf %47 : vector<64x2xf32> to vector<64x2xbf16>
    %c0_49 = arith.constant 0 : index
    %c10_50 = arith.constant 10 : index
    %49 = vector.load %arg12[%c0_49, %c10_50] : memref<64x24xbf16, #tpu.memory_space<vmem>>, vector<64x2xbf16>
    tpu.vector_store %arg12[%c0_49, %c10_50], %48 {strides = array<i32>} : memref<64x24xbf16, #tpu.memory_space<vmem>>, vector<64x2xbf16>,
    %c0_51 = arith.constant 0 : index
    %c16_52 = arith.constant 16 : index
    %50 = vector.load %arg11[%c0_51, %c16_52] : memref<64x36xf32, #tpu.memory_space<vmem>>, vector<64x2xf32>
    %c0_53 = arith.constant 0 : index
    %c18 = arith.constant 18 : index
    %51 = vector.load %arg11[%c0_53, %c18] : memref<64x36xf32, #tpu.memory_space<vmem>>, vector<64x2xf32>
    %52 = arith.maximumf %50, %51 : vector<64x2xf32>
    %c0_54 = arith.constant 0 : index
    %c20 = arith.constant 20 : index
    %53 = vector.load %arg11[%c0_54, %c20] : memref<64x36xf32, #tpu.memory_space<vmem>>, vector<64x2xf32>
    %54 = arith.maximumf %52, %53 : vector<64x2xf32>
    %55 = arith.truncf %54 : vector<64x2xf32> to vector<64x2xbf16>
    %c0_55 = arith.constant 0 : index
    %c12_56 = arith.constant 12 : index
    %56 = vector.load %arg12[%c0_55, %c12_56] : memref<64x24xbf16, #tpu.memory_space<vmem>>, vector<64x2xbf16>
    tpu.vector_store %arg12[%c0_55, %c12_56], %55 {strides = array<i32>} : memref<64x24xbf16, #tpu.memory_space<vmem>>, vector<64x2xbf16>,
    %c0_57 = arith.constant 0 : index
    %c20_58 = arith.constant 20 : index
    %57 = vector.load %arg11[%c0_57, %c20_58] : memref<64x36xf32, #tpu.memory_space<vmem>>, vector<64x2xf32>
    %c0_59 = arith.constant 0 : index
    %c22 = arith.constant 22 : index
    %58 = vector.load %arg11[%c0_59, %c22] : memref<64x36xf32, #tpu.memory_space<vmem>>, vector<64x2xf32>
    %59 = arith.maximumf %57, %58 : vector<64x2xf32>
    %c0_60 = arith.constant 0 : index
    %c24 = arith.constant 24 : index
    %60 = vector.load %arg11[%c0_60, %c24] : memref<64x36xf32, #tpu.memory_space<vmem>>, vector<64x2xf32>
    %61 = arith.maximumf %59, %60 : vector<64x2xf32>
    %62 = arith.truncf %61 : vector<64x2xf32> to vector<64x2xbf16>
    %c0_61 = arith.constant 0 : index
    %c14_62 = arith.constant 14 : index
    %63 = vector.load %arg12[%c0_61, %c14_62] : memref<64x24xbf16, #tpu.memory_space<vmem>>, vector<64x2xbf16>
    tpu.vector_store %arg12[%c0_61, %c14_62], %62 {strides = array<i32>} : memref<64x24xbf16, #tpu.memory_space<vmem>>, vector<64x2xbf16>,
    %c0_63 = arith.constant 0 : index
    %c24_64 = arith.constant 24 : index
    %64 = vector.load %arg11[%c0_63, %c24_64] : memref<64x36xf32, #tpu.memory_space<vmem>>, vector<64x2xf32>
    %c0_65 = arith.constant 0 : index
    %c26 = arith.constant 26 : index
    %65 = vector.load %arg11[%c0_65, %c26] : memref<64x36xf32, #tpu.memory_space<vmem>>, vector<64x2xf32>
    %66 = arith.maximumf %64, %65 : vector<64x2xf32>
    %c0_66 = arith.constant 0 : index
    %c28 = arith.constant 28 : index
    %67 = vector.load %arg11[%c0_66, %c28] : memref<64x36xf32, #tpu.memory_space<vmem>>, vector<64x2xf32>
    %68 = arith.maximumf %66, %67 : vector<64x2xf32>
    %69 = arith.truncf %68 : vector<64x2xf32> to vector<64x2xbf16>
    %c0_67 = arith.constant 0 : index
    %c16_68 = arith.constant 16 : index
    %70 = vector.load %arg12[%c0_67, %c16_68] : memref<64x24xbf16, #tpu.memory_space<vmem>>, vector<64x2xbf16>
    tpu.vector_store %arg12[%c0_67, %c16_68], %69 {strides = array<i32>} : memref<64x24xbf16, #tpu.memory_space<vmem>>, vector<64x2xbf16>,
    %c0_69 = arith.constant 0 : index
    %c28_70 = arith.constant 28 : index
    %71 = vector.load %arg11[%c0_69, %c28_70] : memref<64x36xf32, #tpu.memory_space<vmem>>, vector<64x2xf32>
    %c0_71 = arith.constant 0 : index
    %c30 = arith.constant 30 : index
    %72 = vector.load %arg11[%c0_71, %c30] : memref<64x36xf32, #tpu.memory_space<vmem>>, vector<64x2xf32>
    %73 = arith.maximumf %71, %72 : vector<64x2xf32>
    %c0_72 = arith.constant 0 : index
    %c32 = arith.constant 32 : index
    %74 = vector.load %arg11[%c0_72, %c32] : memref<64x36xf32, #tpu.memory_space<vmem>>, vector<64x2xf32>
    %75 = arith.maximumf %73, %74 : vector<64x2xf32>
    %76 = arith.truncf %75 : vector<64x2xf32> to vector<64x2xbf16>
    %c0_73 = arith.constant 0 : index
    %c18_74 = arith.constant 18 : index
    %77 = vector.load %arg12[%c0_73, %c18_74] : memref<64x24xbf16, #tpu.memory_space<vmem>>, vector<64x2xbf16>
    tpu.vector_store %arg12[%c0_73, %c18_74], %76 {strides = array<i32>} : memref<64x24xbf16, #tpu.memory_space<vmem>>, vector<64x2xbf16>,
    %c0_i32 = arith.constant 0 : i32
    %c4_i32 = arith.constant 4 : i32
    %78 = arith.addi %c0_i32, %c4_i32 : i32
    %c1_i32 = arith.constant 1 : i32
    scf.for %arg14 = %c0_i32 to %78 step %c1_i32  : i32 {
      %c0_88 = arith.constant 0 : index
      %c0_89 = arith.constant 0 : index
      %100 = vector.load %arg12[%c0_88, %c0_89] : memref<64x24xbf16, #tpu.memory_space<vmem>>, vector<64x16xbf16>
      %c0_90 = arith.constant 0 : index
      %c2_91 = arith.constant 2 : index
      %101 = vector.load %arg12[%c0_90, %c2_91] : memref<64x24xbf16, #tpu.memory_space<vmem>>, vector<64x16xbf16>
      %c0_92 = arith.constant 0 : index
      %c4_93 = arith.constant 4 : index
      %102 = vector.load %arg12[%c0_92, %c4_93] : memref<64x24xbf16, #tpu.memory_space<vmem>>, vector<64x16xbf16>
      %c0_94 = arith.constant 0 : index
      %c6_95 = arith.constant 6 : index
      %103 = vector.load %arg12[%c0_94, %c6_95] : memref<64x24xbf16, #tpu.memory_space<vmem>>, vector<64x16xbf16>
      %c0_96 = arith.constant 0 : index
      %c8_97 = arith.constant 8 : index
      %104 = vector.load %arg12[%c0_96, %c8_97] : memref<64x24xbf16, #tpu.memory_space<vmem>>, vector<64x16xbf16>
      %105 = tpu.concatenate %100, %101, %102, %103, %104 in 0 : vector<64x16xbf16>, vector<64x16xbf16>, vector<64x16xbf16>, vector<64x16xbf16>, vector<64x16xbf16> -> vector<320x16xbf16>
      %106 = arith.index_cast %arg14 : i32 to index
      %c0_98 = arith.constant 0 : index
      %c0_99 = arith.constant 0 : index
      %107 = vector.load %arg4[%106, %c0_98, %c0_99] : memref<4x64x320xbf16, #tpu.memory_space<vmem>>, vector<1x64x320xbf16>
      %108 = vector.shape_cast %107 : vector<1x64x320xbf16> to vector<64x320xbf16>
      %cst_100 = arith.constant dense<0.000000e+00> : vector<64x16xf32>
      %109 = tpu.matmul %108, %105, %cst_100 {dimension_numbers = #tpu.dot_dimension_numbers<[1], [0], [0], [1], [0, 0, 1, 1], [], []>} : vector<64x320xbf16>, vector<320x16xbf16>, vector<64x16xf32> -> vector<64x16xf32>
      %110 = arith.index_cast %arg14 : i32 to index
      %c0_101 = arith.constant 0 : index
      %c0_102 = arith.constant 0 : index
      %111 = vector.load %arg5[%110, %c0_101, %c0_102] : memref<4x64x1xf32, #tpu.memory_space<vmem>>, vector<1x64x1xf32>
      %112 = vector.shape_cast %111 : vector<1x64x1xf32> to vector<64x1xf32>
      %113 = vector.broadcast %112 : vector<64x1xf32> to vector<64x16xf32>
      %114 = arith.addf %109, %113 : vector<64x16xf32>
      %cst_103 = arith.constant 0.000000e+00 : f32
      %115 = vector.broadcast %cst_103 : f32 to vector<64x16xf32>
      %116 = arith.maximumf %114, %115 : vector<64x16xf32>
      %117 = arith.truncf %116 : vector<64x16xf32> to vector<64x16xbf16>
      %c0_104 = arith.constant 0 : index
      %c4_105 = arith.constant 4 : index
      %118 = vector.load %arg12[%c0_104, %c4_105] : memref<64x24xbf16, #tpu.memory_space<vmem>>, vector<64x16xbf16>
      tpu.vector_store %arg12[%c0_104, %c4_105], %117 {strides = array<i32>} : memref<64x24xbf16, #tpu.memory_space<vmem>>, vector<64x16xbf16>,
      %c0_106 = arith.constant 0 : index
      %c4_107 = arith.constant 4 : index
      %119 = vector.load %arg12[%c0_106, %c4_107] : memref<64x24xbf16, #tpu.memory_space<vmem>>, vector<64x2xbf16>
      %c0_108 = arith.constant 0 : index
      %c6_109 = arith.constant 6 : index
      %120 = vector.load %arg12[%c0_108, %c6_109] : memref<64x24xbf16, #tpu.memory_space<vmem>>, vector<64x2xbf16>
      %c0_110 = arith.constant 0 : index
      %c8_111 = arith.constant 8 : index
      %121 = vector.load %arg12[%c0_110, %c8_111] : memref<64x24xbf16, #tpu.memory_space<vmem>>, vector<64x2xbf16>
      %c0_112 = arith.constant 0 : index
      %c10_113 = arith.constant 10 : index
      %122 = vector.load %arg12[%c0_112, %c10_113] : memref<64x24xbf16, #tpu.memory_space<vmem>>, vector<64x2xbf16>
      %c0_114 = arith.constant 0 : index
      %c12_115 = arith.constant 12 : index
      %123 = vector.load %arg12[%c0_114, %c12_115] : memref<64x24xbf16, #tpu.memory_space<vmem>>, vector<64x2xbf16>
      %c0_116 = arith.constant 0 : index
      %c14_117 = arith.constant 14 : index
      %124 = vector.load %arg12[%c0_116, %c14_117] : memref<64x24xbf16, #tpu.memory_space<vmem>>, vector<64x2xbf16>
      %c0_118 = arith.constant 0 : index
      %c16_119 = arith.constant 16 : index
      %125 = vector.load %arg12[%c0_118, %c16_119] : memref<64x24xbf16, #tpu.memory_space<vmem>>, vector<64x2xbf16>
      %c0_120 = arith.constant 0 : index
      %c18_121 = arith.constant 18 : index
      %126 = vector.load %arg12[%c0_120, %c18_121] : memref<64x24xbf16, #tpu.memory_space<vmem>>, vector<64x2xbf16>
      %127 = tpu.concatenate %119, %120, %121, %122, %123, %124, %125, %126 in 0 : vector<64x2xbf16>, vector<64x2xbf16>, vector<64x2xbf16>, vector<64x2xbf16>, vector<64x2xbf16>, vector<64x2xbf16>, vector<64x2xbf16>, vector<64x2xbf16> -> vector<512x2xbf16>
      %128 = arith.index_cast %arg14 : i32 to index
      %c0_122 = arith.constant 0 : index
      %c0_123 = arith.constant 0 : index
      %129 = vector.load %arg6[%128, %c0_122, %c0_123] : memref<4x16x512xbf16, #tpu.memory_space<vmem>>, vector<1x16x512xbf16>
      %130 = vector.shape_cast %129 : vector<1x16x512xbf16> to vector<16x512xbf16>
      %cst_124 = arith.constant dense<0.000000e+00> : vector<16x2xf32>
      %131 = tpu.matmul %130, %127, %cst_124 {dimension_numbers = #tpu.dot_dimension_numbers<[1], [0], [0], [1], [0, 0, 1, 1], [], []>} : vector<16x512xbf16>, vector<512x2xbf16>, vector<16x2xf32> -> vector<16x2xf32>
      %132 = arith.index_cast %arg14 : i32 to index
      %c0_125 = arith.constant 0 : index
      %c0_126 = arith.constant 0 : index
      %133 = vector.load %arg7[%132, %c0_125, %c0_126] : memref<4x16x1xf32, #tpu.memory_space<vmem>>, vector<1x16x1xf32>
      %134 = vector.shape_cast %133 : vector<1x16x1xf32> to vector<16x1xf32>
      %135 = vector.broadcast %134 : vector<16x1xf32> to vector<16x2xf32>
      %136 = arith.addf %131, %135 : vector<16x2xf32>
      %cst_127 = arith.constant 0.000000e+00 : f32
      %137 = vector.broadcast %cst_127 : f32 to vector<16x2xf32>
      %138 = arith.maximumf %136, %137 : vector<16x2xf32>
      %c16_i32 = arith.constant 16 : i32
      %139 = arith.muli %arg14, %c16_i32 : i32
      %140 = tpu.assume_multiple %139, 16 : i32
      %141 = arith.index_cast %140 : i32 to index
      %c0_128 = arith.constant 0 : index
      %142 = vector.load %arg13[%141, %c0_128] : memref<64x2xf32, #tpu.memory_space<vmem>>, vector<16x2xf32>
      tpu.vector_store %arg13[%141, %c0_128], %138 {strides = array<i32>} : memref<64x2xf32, #tpu.memory_space<vmem>>, vector<16x2xf32>,
    }
    %c4_i32_75 = arith.constant 4 : i32
    %c0_76 = arith.constant 0 : index
    %c0_77 = arith.constant 0 : index
    %79 = vector.load %arg13[%c0_76, %c0_77] : memref<64x2xf32, #tpu.memory_space<vmem>>, vector<64x2xf32>
    %80 = arith.truncf %79 : vector<64x2xf32> to vector<64x2xbf16>
    %c0_78 = arith.constant 0 : index
    %c0_79 = arith.constant 0 : index
    %81 = vector.load %arg8[%c0_78, %c0_79] : memref<6x64xbf16, #tpu.memory_space<vmem>>, vector<6x64xbf16>
    %cst_80 = arith.constant dense<0.000000e+00> : vector<6x2xf32>
    %82 = tpu.matmul %81, %80, %cst_80 {dimension_numbers = #tpu.dot_dimension_numbers<[1], [0], [0], [1], [0, 0, 1, 1], [], []>} : vector<6x64xbf16>, vector<64x2xbf16>, vector<6x2xf32> -> vector<6x2xf32>
    %c0_81 = arith.constant 0 : index
    %c0_82 = arith.constant 0 : index
    %83 = vector.load %arg9[%c0_81, %c0_82] : memref<6x1xf32, #tpu.memory_space<vmem>>, vector<6x1xf32>
    %84 = vector.broadcast %83 : vector<6x1xf32> to vector<6x2xf32>
    %85 = arith.addf %82, %84 : vector<6x2xf32>
    %cst_83 = arith.constant dense<0xFF800000> : vector<2xf32>
    %86 = vector.multi_reduction <maximumf>, %85, %cst_83 [0] : vector<6x2xf32> to vector<2xf32>
    %87 = vector.shape_cast %86 : vector<2xf32> to vector<1x2xf32>
    %88 = vector.broadcast %87 : vector<1x2xf32> to vector<6x2xf32>
    %89 = arith.subf %85, %88 : vector<6x2xf32>
    %90 = math.exp %89 : vector<6x2xf32>
    %cst_84 = arith.constant dense<0.000000e+00> : vector<2xf32>
    %91 = vector.multi_reduction <add>, %90, %cst_84 [0] : vector<6x2xf32> to vector<2xf32>
    %92 = vector.shape_cast %91 : vector<2xf32> to vector<1x2xf32>
    %93 = math.log %92 : vector<1x2xf32>
    %94 = arith.addf %87, %93 : vector<1x2xf32>
    %95 = vector.broadcast %94 : vector<1x2xf32> to vector<6x2xf32>
    %96 = arith.subf %85, %95 : vector<6x2xf32>
    %c0_85 = arith.constant 0 : index
    %c0_86 = arith.constant 0 : index
    %c0_87 = arith.constant 0 : index
    %97 = vector.load %arg10[%c0_85, %c0_86, %c0_87] : memref<1x6x2xf32, #tpu.memory_space<vmem>>, vector<1x6x2xf32>
    %98 = vector.shape_cast %97 : vector<1x6x2xf32> to vector<6x2xf32>
    %99 = vector.shape_cast %96 : vector<6x2xf32> to vector<1x6x2xf32>
    tpu.vector_store %arg10[%c0_85, %c0_86, %c0_87], %99 {strides = array<i32>} : memref<1x6x2xf32, #tpu.memory_space<vmem>>, vector<1x6x2xf32>,
    return
  }
  func.func @transform_0(%arg0: i32) -> (i32, i32, i32) {
    %c0_i32 = arith.constant 0 : i32
    %c0_i32_0 = arith.constant 0 : i32
    %c0_i32_1 = arith.constant 0 : i32
    return %arg0, %c0_i32, %c0_i32_0 : i32, i32, i32
  }
  func.func @transform_1(%arg0: i32) -> (i32, i32) {
    %c0_i32 = arith.constant 0 : i32
    %c0_i32_0 = arith.constant 0 : i32
    %c0_i32_1 = arith.constant 0 : i32
    return %c0_i32, %c0_i32_0 : i32, i32
  }
  func.func @transform_2(%arg0: i32) -> (i32, i32) {
    %c0_i32 = arith.constant 0 : i32
    %c0_i32_0 = arith.constant 0 : i32
    %c0_i32_1 = arith.constant 0 : i32
    return %c0_i32, %c0_i32_0 : i32, i32
  }
  func.func @transform_3(%arg0: i32) -> (i32, i32, i32) {
    %c0_i32 = arith.constant 0 : i32
    %c0_i32_0 = arith.constant 0 : i32
    %c0_i32_1 = arith.constant 0 : i32
    %c0_i32_2 = arith.constant 0 : i32
    return %c0_i32, %c0_i32_0, %c0_i32_1 : i32, i32, i32
  }
  func.func @transform_4(%arg0: i32) -> (i32, i32, i32) {
    %c0_i32 = arith.constant 0 : i32
    %c0_i32_0 = arith.constant 0 : i32
    %c0_i32_1 = arith.constant 0 : i32
    %c0_i32_2 = arith.constant 0 : i32
    return %c0_i32, %c0_i32_0, %c0_i32_1 : i32, i32, i32
  }
  func.func @transform_5(%arg0: i32) -> (i32, i32, i32) {
    %c0_i32 = arith.constant 0 : i32
    %c0_i32_0 = arith.constant 0 : i32
    %c0_i32_1 = arith.constant 0 : i32
    %c0_i32_2 = arith.constant 0 : i32
    return %c0_i32, %c0_i32_0, %c0_i32_1 : i32, i32, i32
  }
  func.func @transform_6(%arg0: i32) -> (i32, i32, i32) {
    %c0_i32 = arith.constant 0 : i32
    %c0_i32_0 = arith.constant 0 : i32
    %c0_i32_1 = arith.constant 0 : i32
    %c0_i32_2 = arith.constant 0 : i32
    return %c0_i32, %c0_i32_0, %c0_i32_1 : i32, i32, i32
  }
  func.func @transform_7(%arg0: i32) -> (i32, i32) {
    %c0_i32 = arith.constant 0 : i32
    %c0_i32_0 = arith.constant 0 : i32
    %c0_i32_1 = arith.constant 0 : i32
    return %c0_i32, %c0_i32_0 : i32, i32
  }
  func.func @transform_8(%arg0: i32) -> (i32, i32) {
    %c0_i32 = arith.constant 0 : i32
    %c0_i32_0 = arith.constant 0 : i32
    %c0_i32_1 = arith.constant 0 : i32
    return %c0_i32, %c0_i32_0 : i32, i32
  }
  func.func @transform_9(%arg0: i32) -> (i32, i32, i32) {
    %c0_i32 = arith.constant 0 : i32
    %c0_i32_0 = arith.constant 0 : i32
    %c0_i32_1 = arith.constant 0 : i32
    return %arg0, %c0_i32, %c0_i32_0 : i32, i32, i32
  }
}

</mosaic_0001>

<llo_original>
// kernel: calanet_forward.1
$region0: #{calanet_forward.1}
  #allocation0 [shape = 'u32[]', space=smem, size = 0x4, offset = 0x4, fixed_abs, tag = 'smem constant byte address 0x4 - core index']
  #allocation1 [shape = 'u32[144,128]{1,0:T(1,128)}', space=vmem, size = 0x12000, scoped, tag = 'internal scratch']
  #allocation2 [shape = 'f32[64,36]{1,0:T(8,128)}', space=vmem, size = 0x8000, scoped, tag = 'scratch operand']
  #allocation3 [shape = 'bf16[64,24]{1,0:T(8,128)(2,1)}', space=vmem, size = 0x4000, scoped, tag = 'scratch operand']
  #allocation4 [shape = 'f32[64,2]{1,0:T(8,128)}', space=vmem, size = 0x8000, scoped, tag = 'scratch operand']
  %s0 = inlined_call_operand.vmem [shape: bf16[1,8,40], index: 0, kind: input, shape index: {}]
  %s1 = inlined_call_operand.vmem [shape: bf16[64,40], index: 1, kind: input, shape index: {}]
  %s2 = inlined_call_operand.vmem [shape: f32[64,1], index: 2, kind: input, shape index: {}]
  %s3 = inlined_call_operand.vmem [shape: bf16[4,64,320], index: 3, kind: input, shape index: {}]
  %s4 = inlined_call_operand.vmem [shape: f32[4,64,1], index: 4, kind: input, shape index: {}]
  %s5 = inlined_call_operand.vmem [shape: bf16[4,16,512], index: 5, kind: input, shape index: {}]
  %s6 = inlined_call_operand.vmem [shape: f32[4,16,1], index: 6, kind: input, shape index: {}]
  %s7 = inlined_call_operand.hbm [shape: bf16[6,64], index: 7, kind: input, shape index: {}]
  %s8 = inlined_call_operand.vmem [shape: f32[6,1], index: 8, kind: input, shape index: {}]
  %s9 = inlined_call_operand.vmem [shape: f32[1,6,2], index: 9, kind: output, shape index: {}]
  %s10 = sld [smem:[#allocation0]]
  $region57: #{calanet_forward.1} parent=0
    _
  %s12 = ssub.s32 1, %s10
  %s13 = scalar_select 0, %s12, %s10
  $region1: #{calanet_forward.1} parent=0
    #allocation5 [shape = 'u8[2048]{0}', space=vmem, size = 0x800, scoped, tag = 'input window, operand 7, single buffered']
    #allocation6 [shape = 's32[1]{0}', space=sflag, size = 0x4, scoped, tag = 'scoped memory for calanet_forward.1']
    %14 = vsyncpa [#allocation6], 0
    // Predicated region
    $region2: #{calanet_forward.1} parent=1 // pred_check
      _
    $region3: #{calanet_forward.1} parent=1 // pred_check_branch
      %16 = sbr.rel (0) target = $region5
    $region4: #{calanet_forward.1} parent=1 // pred_region
      _
    $region5: #{calanet_forward.1} parent=1 // pred_fallthru
      _
    // Predicated region
    $region6: #{calanet_forward.1} parent=1 // pred_check
      _
    $region7: #{calanet_forward.1} parent=1 // pred_check_branch
      %18 = sbr.rel (0) target = $region9
    $region8: #{calanet_forward.1} parent=1 // pred_region
      _
    $region9: #{calanet_forward.1} parent=1 // pred_fallthru
      _
    // Predicated region
    $region10: #{calanet_forward.1} parent=1 // pred_check
      _
    $region11: #{calanet_forward.1} parent=1 // pred_check_branch
      %20 = sbr.rel (0) target = $region13
    $region12: #{calanet_forward.1} parent=1 // pred_region
      _
    $region13: #{calanet_forward.1} parent=1 // pred_fallthru
      _
    // Predicated region
    $region14: #{calanet_forward.1} parent=1 // pred_check
      _
    $region15: #{calanet_forward.1} parent=1 // pred_check_branch
      %22 = sbr.rel (0) target = $region17
    $region16: #{calanet_forward.1} parent=1 // pred_region
      _
    $region17: #{calanet_forward.1} parent=1 // pred_fallthru
      _
    // Predicated region
    $region18: #{calanet_forward.1} parent=1 // pred_check
      _
    $region19: #{calanet_forward.1} parent=1 // pred_check_branch
      %24 = sbr.rel (0) target = $region21
    $region20: #{calanet_forward.1} parent=1 // pred_region
      _
    $region21: #{calanet_forward.1} parent=1 // pred_fallthru
      _
    // Predicated region
    $region22: #{calanet_forward.1} parent=1 // pred_check
      _
    $region23: #{calanet_forward.1} parent=1 // pred_check_branch
      %26 = sbr.rel (0) target = $region25
    $region24: #{calanet_forward.1} parent=1 // pred_region
      _
    $region25: #{calanet_forward.1} parent=1 // pred_fallthru
      _
    // Predicated region
    $region26: #{calanet_forward.1} parent=1 // pred_check
      _
    $region27: #{calanet_forward.1} parent=1 // pred_check_branch
      %28 = sbr.rel (0) target = $region29
    $region28: #{calanet_forward.1} parent=1 // pred_region
      _
    $region29: #{calanet_forward.1} parent=1 // pred_fallthru
      _
    // Predicated region
    $region30: #{calanet_forward.1} parent=1 // pred_check
      _
    $region31: #{calanet_forward.1} parent=1 // pred_check_branch
      %30 = sbr.rel (0) target = $region33
    $region32: #{calanet_forward.1} parent=1 // pred_region
      %s32 = ssub.s32 64, 64
      %33 = vsyncadd [#allocation6], %s32
      %s35 = sshll.u32 [#allocation5], 4
      %s36 = int_to_ptr.vmem [resolvable:$true] %s35
      %38 = dma.hbm_to_vmem [thread:$0]  %s7, 64, %s36, [#allocation6]
    $region33: #{calanet_forward.1} parent=1 // pred_fallthru
      _
    // Predicated region
    $region34: #{calanet_forward.1} parent=1 // pred_check
      _
    $region35: #{calanet_forward.1} parent=1 // pred_check_branch
      %40 = sbr.rel (0) target = $region37
    $region36: #{calanet_forward.1} parent=1 // pred_region
      _
    $region37: #{calanet_forward.1} parent=1 // pred_fallthru
      _
    // Predicated region
    $region38: #{calanet_forward.1} parent=1 // pred_check
      _
    $region39: #{calanet_forward.1} parent=1 // pred_check_branch
      %42 = sbr.rel (0) target = $region41
    $region40: #{calanet_forward.1} parent=1 // pred_region
      %43 = dma.done [#allocation6], 64
    $region41: #{calanet_forward.1} parent=1 // pred_fallthru
      _
    %v45 = vld [vmem:[%s0] sm:$0xf]
    %v47 = vunpack.c.l.b16 %v45
    %v48 = vpack.c.b16 %v47, %v47
    %49 = vrot.lane.b32.xlu0 %v48, 126
    %v50 = vpop.permute.xlu0 %49
    %51 = vrot.lane.b32.xlu0 %v48, 124
    %v52 = vpop.permute.xlu0 %51
    %53 = vrot.lane.b32.xlu0 %v48, 122
    %v54 = vpop.permute.xlu0 %53
    %55 = vrot.lane.b32.xlu0 %v48, 120
    %v56 = vpop.permute.xlu0 %55
    %vm57 = vcmask 1043456
    %v60 = vsel %vm57, %v45, %v50
    %v64 = vsel %vm57, %v52, %v54
    %v66 = vld [vmem:[%s1] sm:$0xf]
    %v67 = vld [vmem:[%s1 + $0x4] sm:$0xf]
    %v68 = vld [vmem:[%s1 + $0x8] sm:$0xf]
    %v69 = vld [vmem:[%s1 + $0xc] sm:$0xf]
    %v70 = vld [vmem:[%s1 + $0x10] sm:$0xf]
    %v71 = vld [vmem:[%s1 + $0x14] sm:$0xf]
    %v72 = vld [vmem:[%s1 + $0x18] sm:$0xf]
    %v73 = vld [vmem:[%s1 + $0x1c] sm:$0xf]
    %v74 = vld [vmem:[%s2] sm:$0xff]
    %v75 = vld [vmem:[%s2 + $0x8] sm:$0xff]
    %v76 = vld [vmem:[%s2 + $0x10] sm:$0xff]
    %v77 = vld [vmem:[%s2 + $0x18] sm:$0xff]
    %v78 = vld [vmem:[%s2 + $0x20] sm:$0xff]
    %v79 = vld [vmem:[%s2 + $0x28] sm:$0xff]
    %v80 = vld [vmem:[%s2 + $0x30] sm:$0xff]
    %v81 = vld [vmem:[%s2 + $0x38] sm:$0xff]
    %83 = vset.pattern.permute.xlu0 0
    %84 = vperm.xlu0 %83, %v74
    %v85 = vpop.permute.xlu0 %84
    %88 = vset.pattern.permute.xlu0 0
    %89 = vperm.xlu0 %88, %v75
    %v90 = vpop.permute.xlu0 %89
    %93 = vset.pattern.permute.xlu0 0
    %94 = vperm.xlu0 %93, %v76
    %v95 = vpop.permute.xlu0 %94
    %98 = vset.pattern.permute.xlu0 0
    %99 = vperm.xlu0 %98, %v77
    %v100 = vpop.permute.xlu0 %99
    %103 = vset.pattern.permute.xlu0 0
    %104 = vperm.xlu0 %103, %v78
    %v105 = vpop.permute.xlu0 %104
    %108 = vset.pattern.permute.xlu0 0
    %109 = vperm.xlu0 %108, %v79
    %v110 = vpop.permute.xlu0 %109
    %113 = vset.pattern.permute.xlu0 0
    %114 = vperm.xlu0 %113, %v80
    %v115 = vpop.permute.xlu0 %114
    %118 = vset.pattern.permute.xlu0 0
    %119 = vperm.xlu0 %118, %v81
    %v120 = vpop.permute.xlu0 %119
    %v130 = vunpack.c.l.b16 %v66
    %v131 = vunpack.c.l.b16 %v67
    %v132 = vunpack.c.l.b16 %v68
    %v133 = vunpack.c.l.b16 %v69
    %v134 = vunpack.c.l.b16 %v70
    %v135 = vunpack.c.l.b16 %v71
    %v136 = vunpack.c.l.b16 %v72
    %v137 = vunpack.c.l.b16 %v73
    %v138 = vpack.c.b16 %v131, %v130
    %v139 = vpack.c.b16 %v133, %v132
    %v140 = vpack.c.b16 %v135, %v134
    %v141 = vpack.c.b16 %v137, %v136
    %vm142 = vcmask 326656
    %v144 = vsel %vm142, %v138, 0
    %v147 = vsel %vm142, %v139, 0
    %v150 = vsel %vm142, %v140, 0
    %v153 = vsel %vm142, %v141, 0
    %v156 = vsel %vm57, %v56, 0
    %158 = vmatprep.subr.bf16.mxu0 0
    %159 = vmatpush1.bf16.msra.mxu0 0
    %160 = vmatprep.subr.bf16.mxu0 0
    %161 = vmatpush1.bf16.msra.mxu0 0
    %162 = vmatprep.subr.bf16.mxu0 0
    %163 = vmatpush1.bf16.msra.mxu0 0
    %164 = vmatprep.subr.bf16.mxu0 0
    %165 = vmatpush1.bf16.msra.mxu0 0
    %166 = vmatprep.subr.bf16.mxu0 0
    %167 = vmatpush1.bf16.msra.mxu0 0
    %168 = vmatprep.subr.bf16.mxu0 0
    %169 = vmatpush1.bf16.msra.mxu0 %v156
    %170 = vmatprep.subr.bf16.mxu0 0
    %171 = vmatpush1.bf16.msra.mxu0 %v64
    %172 = vmatprep.subr.bf16.mxu0 0
    %173 = vmatpush1.bf16.msra.mxu0 %v60
    %174 = vmatprep.subr.bf16.mxu0 0
    %175 = vmatpush2.bf16.msra.mxu0 0
    %176 = vmatprep.subr.bf16.mxu0 0
    %177 = vmatpush2.bf16.msra.mxu0 0
    %178 = vmatprep.subr.bf16.mxu0 0
    %179 = vmatpush2.bf16.msra.mxu0 0
    %180 = vmatprep.subr.bf16.mxu0 0
    %181 = vmatpush2.bf16.msra.mxu0 0
    %182 = vmatprep.subr.bf16.mxu0 0
    %183 = vmatpush2.bf16.msra.mxu0 0
    %184 = vmatprep.subr.bf16.mxu0 0
    %185 = vmatpush2.bf16.msra.mxu0 0
    %186 = vmatprep.subr.bf16.mxu0 0
    %187 = vmatpush2.bf16.msra.mxu0 0
    %188 = vmatprep.subr.bf16.mxu0 0
    %189 = vmatpush2.bf16.msra.mxu0 0
    %190 = vmatprep.mubr.bf16.mxu0 0
    %191 = vmatmul.mubr.bf16.gmra.mxu0 %v144
    %v192 = vpop.f32.mrf.mxu0
    %v193 = vadd.f32 %v85, %v192
    %v194 = vpop.f32.mrf.mxu0
    %v195 = vpop.f32.mrf.mxu0
    %v196 = vadd.f32 %v90, %v195
    %v197 = vpop.f32.mrf.mxu0
    %198 = vmatprep.mubr.bf16.mxu0 0
    %199 = vmatmul.mubr.bf16.gmra.mxu0 %v147
    %v200 = vpop.f32.mrf.mxu0
    %v201 = vadd.f32 %v95, %v200
    %v202 = vpop.f32.mrf.mxu0
    %v203 = vpop.f32.mrf.mxu0
    %v204 = vadd.f32 %v100, %v203
    %v205 = vpop.f32.mrf.mxu0
    %206 = vmatprep.mubr.bf16.mxu0 0
    %207 = vmatmul.mubr.bf16.gmra.mxu0 %v150
    %v208 = vpop.f32.mrf.mxu0
    %v209 = vadd.f32 %v105, %v208
    %v210 = vpop.f32.mrf.mxu0
    %v211 = vpop.f32.mrf.mxu0
    %v212 = vadd.f32 %v110, %v211
    %v213 = vpop.f32.mrf.mxu0
    %214 = vmatprep.mubr.bf16.mxu0 0
    %215 = vmatmul.mubr.bf16.gmra.mxu0 %v153
    %v216 = vpop.f32.mrf.mxu0
    %v217 = vadd.f32 %v115, %v216
    %v218 = vpop.f32.mrf.mxu0
    %v219 = vpop.f32.mrf.mxu0
    %v220 = vadd.f32 %v120, %v219
    %v221 = vpop.f32.mrf.mxu0
    %222 = vdwg.mxu0
    %vm223 = vcmask 15360
    %224 = vst.msk [vmem:[#allocation2] sm:$0xff] %vm223, -3.4028235e+38
    %225 = vst.msk [vmem:[#allocation2 + $0x8] sm:$0xff] %vm223, -3.4028235e+38
    %226 = vst.msk [vmem:[#allocation2 + $0x10] sm:$0xff] %vm223, -3.4028235e+38
    %227 = vst.msk [vmem:[#allocation2 + $0x18] sm:$0xff] %vm223, -3.4028235e+38
    %228 = vst.msk [vmem:[#allocation2 + $0x20] sm:$0xff] %vm223, -3.4028235e+38
    %229 = vst.msk [vmem:[#allocation2 + $0x28] sm:$0xff] %vm223, -3.4028235e+38
    %230 = vst.msk [vmem:[#allocation2 + $0x30] sm:$0xff] %vm223, -3.4028235e+38
    %231 = vst.msk [vmem:[#allocation2 + $0x38] sm:$0xff] %vm223, -3.4028235e+38
    %vm232 = vcmask 294160
    %233 = vst.msk [vmem:[#allocation2] sm:$0xff] %vm232, -3.4028235e+38
    %234 = vst.msk [vmem:[#allocation2 + $0x8] sm:$0xff] %vm232, -3.4028235e+38
    %235 = vst.msk [vmem:[#allocation2 + $0x10] sm:$0xff] %vm232, -3.4028235e+38
    %236 = vst.msk [vmem:[#allocation2 + $0x18] sm:$0xff] %vm232, -3.4028235e+38
    %237 = vst.msk [vmem:[#allocation2 + $0x20] sm:$0xff] %vm232, -3.4028235e+38
    %238 = vst.msk [vmem:[#allocation2 + $0x28] sm:$0xff] %vm232, -3.4028235e+38
    %239 = vst.msk [vmem:[#allocation2 + $0x30] sm:$0xff] %vm232, -3.4028235e+38
    %240 = vst.msk [vmem:[#allocation2 + $0x38] sm:$0xff] %vm232, -3.4028235e+38
    %249 = vrot.lane.b32.xlu0 %v193, 2
    %v250 = vpop.permute.xlu0 %249
    %251 = vrot.lane.b32.xlu0 %v196, 2
    %v252 = vpop.permute.xlu0 %251
    %253 = vrot.lane.b32.xlu0 %v201, 2
    %v254 = vpop.permute.xlu0 %253
    %255 = vrot.lane.b32.xlu0 %v204, 2
    %v256 = vpop.permute.xlu0 %255
    %257 = vrot.lane.b32.xlu0 %v209, 2
    %v258 = vpop.permute.xlu0 %257
    %259 = vrot.lane.b32.xlu0 %v212, 2
    %v260 = vpop.permute.xlu0 %259
    %261 = vrot.lane.b32.xlu0 %v217, 2
    %v262 = vpop.permute.xlu0 %261
    %263 = vrot.lane.b32.xlu0 %v220, 2
    %v264 = vpop.permute.xlu0 %263
    %vm273 = vcmask 277520
    %274 = vst.msk [vmem:[#allocation2] sm:$0xff] %vm273, %v250
    %275 = vst.msk [vmem:[#allocation2 + $0x8] sm:$0xff] %vm273, %v252
    %276 = vst.msk [vmem:[#allocation2 + $0x10] sm:$0xff] %vm273, %v254
    %277 = vst.msk [vmem:[#allocation2 + $0x18] sm:$0xff] %vm273, %v256
    %278 = vst.msk [vmem:[#allocation2 + $0x20] sm:$0xff] %vm273, %v258
    %279 = vst.msk [vmem:[#allocation2 + $0x28] sm:$0xff] %vm273, %v260
    %280 = vst.msk [vmem:[#allocation2 + $0x30] sm:$0xff] %vm273, %v262
    %281 = vst.msk [vmem:[#allocation2 + $0x38] sm:$0xff] %vm273, %v264
    %vm282 = vcmask 191488
    %283 = vst.msk [vmem:[#allocation3] sm:$0xf] %vm282, 0
    %284 = vst.msk [vmem:[#allocation3 + $0x4] sm:$0xf] %vm282, 0
    %285 = vst.msk [vmem:[#allocation3 + $0x8] sm:$0xf] %vm282, 0
    %286 = vst.msk [vmem:[#allocation3 + $0xc] sm:$0xf] %vm282, 0
    %287 = vst.msk [vmem:[#allocation3 + $0x10] sm:$0xf] %vm282, 0
    %288 = vst.msk [vmem:[#allocation3 + $0x14] sm:$0xf] %vm282, 0
    %289 = vst.msk [vmem:[#allocation3 + $0x18] sm:$0xf] %vm282, 0
    %290 = vst.msk [vmem:[#allocation3 + $0x1c] sm:$0xf] %vm282, 0
    %v291 = vld [vmem:[#allocation2] sm:$0xff]
    %v292 = vld [vmem:[#allocation2 + $0x8] sm:$0xff]
    %v293 = vld [vmem:[#allocation2 + $0x10] sm:$0xff]
    %v294 = vld [vmem:[#allocation2 + $0x18] sm:$0xff]
    %v295 = vld [vmem:[#allocation2 + $0x20] sm:$0xff]
    %v296 = vld [vmem:[#allocation2 + $0x28] sm:$0xff]
    %v297 = vld [vmem:[#allocation2 + $0x30] sm:$0xff]
    %v298 = vld [vmem:[#allocation2 + $0x38] sm:$0xff]
    %307 = vrot.lane.b32.xlu0 %v291, 126
    %v308 = vpop.permute.xlu0 %307
    %309 = vrot.lane.b32.xlu0 %v292, 126
    %v310 = vpop.permute.xlu0 %309
    %311 = vrot.lane.b32.xlu0 %v293, 126
    %v312 = vpop.permute.xlu0 %311
    %313 = vrot.lane.b32.xlu0 %v294, 126
    %v314 = vpop.permute.xlu0 %313
    %315 = vrot.lane.b32.xlu0 %v295, 126
    %v316 = vpop.permute.xlu0 %315
    %317 = vrot.lane.b32.xlu0 %v296, 126
    %v318 = vpop.permute.xlu0 %317
    %319 = vrot.lane.b32.xlu0 %v297, 126
    %v320 = vpop.permute.xlu0 %319
    %321 = vrot.lane.b32.xlu0 %v298, 126
    %v322 = vpop.permute.xlu0 %321
    %v331 = vmax.f32 %v291, %v308
    %v332 = vmax.f32 %v292, %v310
    %v333 = vmax.f32 %v293, %v312
    %v334 = vmax.f32 %v294, %v314
    %v335 = vmax.f32 %v295, %v316
    %v336 = vmax.f32 %v296, %v318
    %v337 = vmax.f32 %v297, %v320
    %v338 = vmax.f32 %v298, %v322
    %339 = vrot.lane.b32.xlu0 %v291, 124
    %v340 = vpop.permute.xlu0 %339
    %341 = vrot.lane.b32.xlu0 %v292, 124
    %v342 = vpop.permute.xlu0 %341
    %343 = vrot.lane.b32.xlu0 %v293, 124
    %v344 = vpop.permute.xlu0 %343
    %345 = vrot.lane.b32.xlu0 %v294, 124
    %v346 = vpop.permute.xlu0 %345
    %347 = vrot.lane.b32.xlu0 %v295, 124
    %v348 = vpop.permute.xlu0 %347
    %349 = vrot.lane.b32.xlu0 %v296, 124
    %v350 = vpop.permute.xlu0 %349
    %351 = vrot.lane.b32.xlu0 %v297, 124
    %v352 = vpop.permute.xlu0 %351
    %353 = vrot.lane.b32.xlu0 %v298, 124
    %v354 = vpop.permute.xlu0 %353
    %v363 = vmax.f32 %v331, %v340
    %v364 = vmax.f32 %v332, %v342
    %v365 = vmax.f32 %v333, %v344
    %v366 = vmax.f32 %v334, %v346
    %v367 = vmax.f32 %v335, %v348
    %v368 = vmax.f32 %v336, %v350
    %v369 = vmax.f32 %v337, %v352
    %v370 = vmax.f32 %v338, %v354
    %v371 = vpack.c.bf16 %v364, %v363
    %v372 = vpack.c.bf16 %v366, %v365
    %v373 = vpack.c.bf16 %v368, %v367
    %v374 = vpack.c.bf16 %v370, %v369
    %v379 = vunpack.c.l.b16 %v371
    %v380 = vunpack.c.h.b16 %v371
    %v381 = vunpack.c.l.b16 %v372
    %v382 = vunpack.c.h.b16 %v372
    %v383 = vunpack.c.l.b16 %v373
    %v384 = vunpack.c.h.b16 %v373
    %v385 = vunpack.c.l.b16 %v374
    %v386 = vunpack.c.h.b16 %v374
    %v387 = vpack.c.b16 %v379, %v379
    %v388 = vpack.c.b16 %v380, %v380
    %v389 = vpack.c.b16 %v381, %v381
    %v390 = vpack.c.b16 %v382, %v382
    %v391 = vpack.c.b16 %v383, %v383
    %v392 = vpack.c.b16 %v384, %v384
    %v393 = vpack.c.b16 %v385, %v385
    %v394 = vpack.c.b16 %v386, %v386
    %395 = vrot.lane.b32.xlu0 %v387, 4
    %v396 = vpop.permute.xlu0 %395
    %397 = vrot.lane.b32.xlu0 %v388, 4
    %v398 = vpop.permute.xlu0 %397
    %399 = vrot.lane.b32.xlu0 %v389, 4
    %v400 = vpop.permute.xlu0 %399
    %401 = vrot.lane.b32.xlu0 %v390, 4
    %v402 = vpop.permute.xlu0 %401
    %403 = vrot.lane.b32.xlu0 %v391, 4
    %v404 = vpop.permute.xlu0 %403
    %405 = vrot.lane.b32.xlu0 %v392, 4
    %v406 = vpop.permute.xlu0 %405
    %407 = vrot.lane.b32.xlu0 %v393, 4
    %v408 = vpop.permute.xlu0 %407
    %409 = vrot.lane.b32.xlu0 %v394, 4
    %v410 = vpop.permute.xlu0 %409
    %vm419 = vcmask 44064
    %420 = vst.msk [vmem:[#allocation3] sm:$0xf] %vm419, %v396
    %421 = vst.msk [vmem:[#allocation3 + $0x4] sm:$0xf] %vm419, %v398
    %422 = vst.msk [vmem:[#allocation3 + $0x8] sm:$0xf] %vm419, %v400
    %423 = vst.msk [vmem:[#allocation3 + $0xc] sm:$0xf] %vm419, %v402
    %424 = vst.msk [vmem:[#allocation3 + $0x10] sm:$0xf] %vm419, %v404
    %425 = vst.msk [vmem:[#allocation3 + $0x14] sm:$0xf] %vm419, %v406
    %426 = vst.msk [vmem:[#allocation3 + $0x18] sm:$0xf] %vm419, %v408
    %427 = vst.msk [vmem:[#allocation3 + $0x1c] sm:$0xf] %vm419, %v410
    %v428 = vld [vmem:[#allocation2] sm:$0xff]
    %v429 = vld [vmem:[#allocation2 + $0x8] sm:$0xff]
    %v430 = vld [vmem:[#allocation2 + $0x10] sm:$0xff]
    %v431 = vld [vmem:[#allocation2 + $0x18] sm:$0xff]
    %v432 = vld [vmem:[#allocation2 + $0x20] sm:$0xff]
    %v433 = vld [vmem:[#allocation2 + $0x28] sm:$0xff]
    %v434 = vld [vmem:[#allocation2 + $0x30] sm:$0xff]
    %v435 = vld [vmem:[#allocation2 + $0x38] sm:$0xff]
    %444 = vrot.lane.b32.xlu0 %v428, 126
    %v445 = vpop.permute.xlu0 %444
    %446 = vrot.lane.b32.xlu0 %v429, 126
    %v447 = vpop.permute.xlu0 %446
    %448 = vrot.lane.b32.xlu0 %v430, 126
    %v449 = vpop.permute.xlu0 %448
    %450 = vrot.lane.b32.xlu0 %v431, 126
    %v451 = vpop.permute.xlu0 %450
    %452 = vrot.lane.b32.xlu0 %v432, 126
    %v453 = vpop.permute.xlu0 %452
    %454 = vrot.lane.b32.xlu0 %v433, 126
    %v455 = vpop.permute.xlu0 %454
    %456 = vrot.lane.b32.xlu0 %v434, 126
    %v457 = vpop.permute.xlu0 %456
    %458 = vrot.lane.b32.xlu0 %v435, 126
    %v459 = vpop.permute.xlu0 %458
    %v468 = vmax.f32 %v428, %v445
    %v469 = vmax.f32 %v429, %v447
    %v470 = vmax.f32 %v430, %v449
    %v471 = vmax.f32 %v431, %v451
    %v472 = vmax.f32 %v432, %v453
    %v473 = vmax.f32 %v433, %v455
    %v474 = vmax.f32 %v434, %v457
    %v475 = vmax.f32 %v435, %v459
    %476 = vrot.lane.b32.xlu0 %v428, 124
    %v477 = vpop.permute.xlu0 %476
    %478 = vrot.lane.b32.xlu0 %v429, 124
    %v479 = vpop.permute.xlu0 %478
    %480 = vrot.lane.b32.xlu0 %v430, 124
    %v481 = vpop.permute.xlu0 %480
    %482 = vrot.lane.b32.xlu0 %v431, 124
    %v483 = vpop.permute.xlu0 %482
    %484 = vrot.lane.b32.xlu0 %v432, 124
    %v485 = vpop.permute.xlu0 %484
    %486 = vrot.lane.b32.xlu0 %v433, 124
    %v487 = vpop.permute.xlu0 %486
    %488 = vrot.lane.b32.xlu0 %v434, 124
    %v489 = vpop.permute.xlu0 %488
    %490 = vrot.lane.b32.xlu0 %v435, 124
    %v491 = vpop.permute.xlu0 %490
    %v500 = vmax.f32 %v468, %v477
    %v501 = vmax.f32 %v469, %v479
    %v502 = vmax.f32 %v470, %v481
    %v503 = vmax.f32 %v471, %v483
    %v504 = vmax.f32 %v472, %v485
    %v505 = vmax.f32 %v473, %v487
    %v506 = vmax.f32 %v474, %v489
    %v507 = vmax.f32 %v475, %v491
    %v508 = vpack.c.bf16 %v501, %v500
    %v509 = vpack.c.bf16 %v503, %v502
    %v510 = vpack.c.bf16 %v505, %v504
    %v511 = vpack.c.bf16 %v507, %v506
    %v516 = vunpack.c.l.b16 %v508
    %v517 = vunpack.c.h.b16 %v508
    %v518 = vunpack.c.l.b16 %v509
    %v519 = vunpack.c.h.b16 %v509
    %v520 = vunpack.c.l.b16 %v510
    %v521 = vunpack.c.h.b16 %v510
    %v522 = vunpack.c.l.b16 %v511
    %v523 = vunpack.c.h.b16 %v511
    %v524 = vpack.c.b16 %v516, %v516
    %v525 = vpack.c.b16 %v517, %v517
    %v526 = vpack.c.b16 %v518, %v518
    %v527 = vpack.c.b16 %v519, %v519
    %v528 = vpack.c.b16 %v520, %v520
    %v529 = vpack.c.b16 %v521, %v521
    %v530 = vpack.c.b16 %v522, %v522
    %v531 = vpack.c.b16 %v523, %v523
    %532 = vrot.lane.b32.xlu0 %v524, 2
    %v533 = vpop.permute.xlu0 %532
    %534 = vrot.lane.b32.xlu0 %v525, 2
    %v535 = vpop.permute.xlu0 %534
    %536 = vrot.lane.b32.xlu0 %v526, 2
    %v537 = vpop.permute.xlu0 %536
    %538 = vrot.lane.b32.xlu0 %v527, 2
    %v539 = vpop.permute.xlu0 %538
    %540 = vrot.lane.b32.xlu0 %v528, 2
    %v541 = vpop.permute.xlu0 %540
    %542 = vrot.lane.b32.xlu0 %v529, 2
    %v543 = vpop.permute.xlu0 %542
    %544 = vrot.lane.b32.xlu0 %v530, 2
    %v545 = vpop.permute.xlu0 %544
    %546 = vrot.lane.b32.xlu0 %v531, 2
    %v547 = vpop.permute.xlu0 %546
    %vm556 = vcmask 60464
    %557 = vst.msk [vmem:[#allocation3] sm:$0xf] %vm556, %v533
    %558 = vst.msk [vmem:[#allocation3 + $0x4] sm:$0xf] %vm556, %v535
    %559 = vst.msk [vmem:[#allocation3 + $0x8] sm:$0xf] %vm556, %v537
    %560 = vst.msk [vmem:[#allocation3 + $0xc] sm:$0xf] %vm556, %v539
    %561 = vst.msk [vmem:[#allocation3 + $0x10] sm:$0xf] %vm556, %v541
    %562 = vst.msk [vmem:[#allocation3 + $0x14] sm:$0xf] %vm556, %v543
    %563 = vst.msk [vmem:[#allocation3 + $0x18] sm:$0xf] %vm556, %v545
    %564 = vst.msk [vmem:[#allocation3 + $0x1c] sm:$0xf] %vm556, %v547
    %v565 = vld [vmem:[#allocation2] sm:$0xff]
    %v566 = vld [vmem:[#allocation2 + $0x8] sm:$0xff]
    %v567 = vld [vmem:[#allocation2 + $0x10] sm:$0xff]
    %v568 = vld [vmem:[#allocation2 + $0x18] sm:$0xff]
    %v569 = vld [vmem:[#allocation2 + $0x20] sm:$0xff]
    %v570 = vld [vmem:[#allocation2 + $0x28] sm:$0xff]
    %v571 = vld [vmem:[#allocation2 + $0x30] sm:$0xff]
    %v572 = vld [vmem:[#allocation2 + $0x38] sm:$0xff]
    %581 = vrot.lane.b32.xlu0 %v565, 126
    %v582 = vpop.permute.xlu0 %581
    %583 = vrot.lane.b32.xlu0 %v566, 126
    %v584 = vpop.permute.xlu0 %583
    %585 = vrot.lane.b32.xlu0 %v567, 126
    %v586 = vpop.permute.xlu0 %585
    %587 = vrot.lane.b32.xlu0 %v568, 126
    %v588 = vpop.permute.xlu0 %587
    %589 = vrot.lane.b32.xlu0 %v569, 126
    %v590 = vpop.permute.xlu0 %589
    %591 = vrot.lane.b32.xlu0 %v570, 126
    %v592 = vpop.permute.xlu0 %591
    %593 = vrot.lane.b32.xlu0 %v571, 126
    %v594 = vpop.permute.xlu0 %593
    %595 = vrot.lane.b32.xlu0 %v572, 126
    %v596 = vpop.permute.xlu0 %595
    %v605 = vmax.f32 %v565, %v582
    %v606 = vmax.f32 %v566, %v584
    %v607 = vmax.f32 %v567, %v586
    %v608 = vmax.f32 %v568, %v588
    %v609 = vmax.f32 %v569, %v590
    %v610 = vmax.f32 %v570, %v592
    %v611 = vmax.f32 %v571, %v594
    %v612 = vmax.f32 %v572, %v596
    %613 = vrot.lane.b32.xlu0 %v565, 124
    %v614 = vpop.permute.xlu0 %613
    %615 = vrot.lane.b32.xlu0 %v566, 124
    %v616 = vpop.permute.xlu0 %615
    %617 = vrot.lane.b32.xlu0 %v567, 124
    %v618 = vpop.permute.xlu0 %617
    %619 = vrot.lane.b32.xlu0 %v568, 124
    %v620 = vpop.permute.xlu0 %619
    %621 = vrot.lane.b32.xlu0 %v569, 124
    %v622 = vpop.permute.xlu0 %621
    %623 = vrot.lane.b32.xlu0 %v570, 124
    %v624 = vpop.permute.xlu0 %623
    %625 = vrot.lane.b32.xlu0 %v571, 124
    %v626 = vpop.permute.xlu0 %625
    %627 = vrot.lane.b32.xlu0 %v572, 124
    %v628 = vpop.permute.xlu0 %627
    %v637 = vmax.f32 %v605, %v614
    %v638 = vmax.f32 %v606, %v616
    %v639 = vmax.f32 %v607, %v618
    %v640 = vmax.f32 %v608, %v620
    %v641 = vmax.f32 %v609, %v622
    %v642 = vmax.f32 %v610, %v624
    %v643 = vmax.f32 %v611, %v626
    %v644 = vmax.f32 %v612, %v628
    %v645 = vpack.c.bf16 %v638, %v637
    %v646 = vpack.c.bf16 %v640, %v639
    %v647 = vpack.c.bf16 %v642, %v641
    %v648 = vpack.c.bf16 %v644, %v643
    %v653 = vunpack.c.l.b16 %v645
    %v654 = vunpack.c.h.b16 %v645
    %v655 = vunpack.c.l.b16 %v646
    %v656 = vunpack.c.h.b16 %v646
    %v657 = vunpack.c.l.b16 %v647
    %v658 = vunpack.c.h.b16 %v647
    %v659 = vunpack.c.l.b16 %v648
    %v660 = vunpack.c.h.b16 %v648
    %v661 = vpack.c.b16 %v653, %v653
    %v662 = vpack.c.b16 %v654, %v654
    %v663 = vpack.c.b16 %v655, %v655
    %v664 = vpack.c.b16 %v656, %v656
    %v665 = vpack.c.b16 %v657, %v657
    %v666 = vpack.c.b16 %v658, %v658
    %v667 = vpack.c.b16 %v659, %v659
    %v668 = vpack.c.b16 %v660, %v660
    %vm677 = vcmask 76864
    %678 = vst.msk [vmem:[#allocation3] sm:$0xf] %vm677, %v661
    %679 = vst.msk [vmem:[#allocation3 + $0x4] sm:$0xf] %vm677, %v662
    %680 = vst.msk [vmem:[#allocation3 + $0x8] sm:$0xf] %vm677, %v663
    %681 = vst.msk [vmem:[#allocation3 + $0xc] sm:$0xf] %vm677, %v664
    %682 = vst.msk [vmem:[#allocation3 + $0x10] sm:$0xf] %vm677, %v665
    %683 = vst.msk [vmem:[#allocation3 + $0x14] sm:$0xf] %vm677, %v666
    %684 = vst.msk [vmem:[#allocation3 + $0x18] sm:$0xf] %vm677, %v667
    %685 = vst.msk [vmem:[#allocation3 + $0x1c] sm:$0xf] %vm677, %v668
    %v686 = vld [vmem:[#allocation2] sm:$0xff]
    %v687 = vld [vmem:[#allocation2 + $0x8] sm:$0xff]
    %v688 = vld [vmem:[#allocation2 + $0x10] sm:$0xff]
    %v689 = vld [vmem:[#allocation2 + $0x18] sm:$0xff]
    %v690 = vld [vmem:[#allocation2 + $0x20] sm:$0xff]
    %v691 = vld [vmem:[#allocation2 + $0x28] sm:$0xff]
    %v692 = vld [vmem:[#allocation2 + $0x30] sm:$0xff]
    %v693 = vld [vmem:[#allocation2 + $0x38] sm:$0xff]
    %702 = vrot.lane.b32.xlu0 %v686, 126
    %v703 = vpop.permute.xlu0 %702
    %704 = vrot.lane.b32.xlu0 %v687, 126
    %v705 = vpop.permute.xlu0 %704
    %706 = vrot.lane.b32.xlu0 %v688, 126
    %v707 = vpop.permute.xlu0 %706
    %708 = vrot.lane.b32.xlu0 %v689, 126
    %v709 = vpop.permute.xlu0 %708
    %710 = vrot.lane.b32.xlu0 %v690, 126
    %v711 = vpop.permute.xlu0 %710
    %712 = vrot.lane.b32.xlu0 %v691, 126
    %v713 = vpop.permute.xlu0 %712
    %714 = vrot.lane.b32.xlu0 %v692, 126
    %v715 = vpop.permute.xlu0 %714
    %716 = vrot.lane.b32.xlu0 %v693, 126
    %v717 = vpop.permute.xlu0 %716
    %v726 = vmax.f32 %v686, %v703
    %v727 = vmax.f32 %v687, %v705
    %v728 = vmax.f32 %v688, %v707
    %v729 = vmax.f32 %v689, %v709
    %v730 = vmax.f32 %v690, %v711
    %v731 = vmax.f32 %v691, %v713
    %v732 = vmax.f32 %v692, %v715
    %v733 = vmax.f32 %v693, %v717
    %734 = vrot.lane.b32.xlu0 %v686, 124
    %v735 = vpop.permute.xlu0 %734
    %736 = vrot.lane.b32.xlu0 %v687, 124
    %v737 = vpop.permute.xlu0 %736
    %738 = vrot.lane.b32.xlu0 %v688, 124
    %v739 = vpop.permute.xlu0 %738
    %740 = vrot.lane.b32.xlu0 %v689, 124
    %v741 = vpop.permute.xlu0 %740
    %742 = vrot.lane.b32.xlu0 %v690, 124
    %v743 = vpop.permute.xlu0 %742
    %744 = vrot.lane.b32.xlu0 %v691, 124
    %v745 = vpop.permute.xlu0 %744
    %746 = vrot.lane.b32.xlu0 %v692, 124
    %v747 = vpop.permute.xlu0 %746
    %748 = vrot.lane.b32.xlu0 %v693, 124
    %v749 = vpop.permute.xlu0 %748
    %v758 = vmax.f32 %v726, %v735
    %v759 = vmax.f32 %v727, %v737
    %v760 = vmax.f32 %v728, %v739
    %v761 = vmax.f32 %v729, %v741
    %v762 = vmax.f32 %v730, %v743
    %v763 = vmax.f32 %v731, %v745
    %v764 = vmax.f32 %v732, %v747
    %v765 = vmax.f32 %v733, %v749
    %v766 = vpack.c.bf16 %v759, %v758
    %v767 = vpack.c.bf16 %v761, %v760
    %v768 = vpack.c.bf16 %v763, %v762
    %v769 = vpack.c.bf16 %v765, %v764
    %v774 = vunpack.c.l.b16 %v766
    %v775 = vunpack.c.h.b16 %v766
    %v776 = vunpack.c.l.b16 %v767
    %v777 = vunpack.c.h.b16 %v767
    %v778 = vunpack.c.l.b16 %v768
    %v779 = vunpack.c.h.b16 %v768
    %v780 = vunpack.c.l.b16 %v769
    %v781 = vunpack.c.h.b16 %v769
    %v782 = vpack.c.b16 %v774, %v774
    %v783 = vpack.c.b16 %v775, %v775
    %v784 = vpack.c.b16 %v776, %v776
    %v785 = vpack.c.b16 %v777, %v777
    %v786 = vpack.c.b16 %v778, %v778
    %v787 = vpack.c.b16 %v779, %v779
    %v788 = vpack.c.b16 %v780, %v780
    %v789 = vpack.c.b16 %v781, %v781
    %790 = vrot.lane.b32.xlu0 %v782, 126
    %v791 = vpop.permute.xlu0 %790
    %792 = vrot.lane.b32.xlu0 %v783, 126
    %v793 = vpop.permute.xlu0 %792
    %794 = vrot.lane.b32.xlu0 %v784, 126
    %v795 = vpop.permute.xlu0 %794
    %796 = vrot.lane.b32.xlu0 %v785, 126
    %v797 = vpop.permute.xlu0 %796
    %798 = vrot.lane.b32.xlu0 %v786, 126
    %v799 = vpop.permute.xlu0 %798
    %800 = vrot.lane.b32.xlu0 %v787, 126
    %v801 = vpop.permute.xlu0 %800
    %802 = vrot.lane.b32.xlu0 %v788, 126
    %v803 = vpop.permute.xlu0 %802
    %804 = vrot.lane.b32.xlu0 %v789, 126
    %v805 = vpop.permute.xlu0 %804
    %vm814 = vcmask 93264
    %815 = vst.msk [vmem:[#allocation3] sm:$0xf] %vm814, %v791
    %816 = vst.msk [vmem:[#allocation3 + $0x4] sm:$0xf] %vm814, %v793
    %817 = vst.msk [vmem:[#allocation3 + $0x8] sm:$0xf] %vm814, %v795
    %818 = vst.msk [vmem:[#allocation3 + $0xc] sm:$0xf] %vm814, %v797
    %819 = vst.msk [vmem:[#allocation3 + $0x10] sm:$0xf] %vm814, %v799
    %820 = vst.msk [vmem:[#allocation3 + $0x14] sm:$0xf] %vm814, %v801
    %821 = vst.msk [vmem:[#allocation3 + $0x18] sm:$0xf] %vm814, %v803
    %822 = vst.msk [vmem:[#allocation3 + $0x1c] sm:$0xf] %vm814, %v805
    %v823 = vld [vmem:[#allocation2] sm:$0xff]
    %v824 = vld [vmem:[#allocation2 + $0x8] sm:$0xff]
    %v825 = vld [vmem:[#allocation2 + $0x10] sm:$0xff]
    %v826 = vld [vmem:[#allocation2 + $0x18] sm:$0xff]
    %v827 = vld [vmem:[#allocation2 + $0x20] sm:$0xff]
    %v828 = vld [vmem:[#allocation2 + $0x28] sm:$0xff]
    %v829 = vld [vmem:[#allocation2 + $0x30] sm:$0xff]
    %v830 = vld [vmem:[#allocation2 + $0x38] sm:$0xff]
    %839 = vrot.lane.b32.xlu0 %v823, 126
    %v840 = vpop.permute.xlu0 %839
    %841 = vrot.lane.b32.xlu0 %v824, 126
    %v842 = vpop.permute.xlu0 %841
    %843 = vrot.lane.b32.xlu0 %v825, 126
    %v844 = vpop.permute.xlu0 %843
    %845 = vrot.lane.b32.xlu0 %v826, 126
    %v846 = vpop.permute.xlu0 %845
    %847 = vrot.lane.b32.xlu0 %v827, 126
    %v848 = vpop.permute.xlu0 %847
    %849 = vrot.lane.b32.xlu0 %v828, 126
    %v850 = vpop.permute.xlu0 %849
    %851 = vrot.lane.b32.xlu0 %v829, 126
    %v852 = vpop.permute.xlu0 %851
    %853 = vrot.lane.b32.xlu0 %v830, 126
    %v854 = vpop.permute.xlu0 %853
    %v863 = vmax.f32 %v823, %v840
    %v864 = vmax.f32 %v824, %v842
    %v865 = vmax.f32 %v825, %v844
    %v866 = vmax.f32 %v826, %v846
    %v867 = vmax.f32 %v827, %v848
    %v868 = vmax.f32 %v828, %v850
    %v869 = vmax.f32 %v829, %v852
    %v870 = vmax.f32 %v830, %v854
    %871 = vrot.lane.b32.xlu0 %v823, 124
    %v872 = vpop.permute.xlu0 %871
    %873 = vrot.lane.b32.xlu0 %v824, 124
    %v874 = vpop.permute.xlu0 %873
    %875 = vrot.lane.b32.xlu0 %v825, 124
    %v876 = vpop.permute.xlu0 %875
    %877 = vrot.lane.b32.xlu0 %v826, 124
    %v878 = vpop.permute.xlu0 %877
    %879 = vrot.lane.b32.xlu0 %v827, 124
    %v880 = vpop.permute.xlu0 %879
    %881 = vrot.lane.b32.xlu0 %v828, 124
    %v882 = vpop.permute.xlu0 %881
    %883 = vrot.lane.b32.xlu0 %v829, 124
    %v884 = vpop.permute.xlu0 %883
    %885 = vrot.lane.b32.xlu0 %v830, 124
    %v886 = vpop.permute.xlu0 %885
    %v895 = vmax.f32 %v863, %v872
    %v896 = vmax.f32 %v864, %v874
    %v897 = vmax.f32 %v865, %v876
    %v898 = vmax.f32 %v866, %v878
    %v899 = vmax.f32 %v867, %v880
    %v900 = vmax.f32 %v868, %v882
    %v901 = vmax.f32 %v869, %v884
    %v902 = vmax.f32 %v870, %v886
    %v903 = vpack.c.bf16 %v896, %v895
    %v904 = vpack.c.bf16 %v898, %v897
    %v905 = vpack.c.bf16 %v900, %v899
    %v906 = vpack.c.bf16 %v902, %v901
    %v911 = vunpack.c.l.b16 %v903
    %v912 = vunpack.c.h.b16 %v903
    %v913 = vunpack.c.l.b16 %v904
    %v914 = vunpack.c.h.b16 %v904
    %v915 = vunpack.c.l.b16 %v905
    %v916 = vunpack.c.h.b16 %v905
    %v917 = vunpack.c.l.b16 %v906
    %v918 = vunpack.c.h.b16 %v906
    %v919 = vpack.c.b16 %v911, %v911
    %v920 = vpack.c.b16 %v912, %v912
    %v921 = vpack.c.b16 %v913, %v913
    %v922 = vpack.c.b16 %v914, %v914
    %v923 = vpack.c.b16 %v915, %v915
    %v924 = vpack.c.b16 %v916, %v916
    %v925 = vpack.c.b16 %v917, %v917
    %v926 = vpack.c.b16 %v918, %v918
    %927 = vrot.lane.b32.xlu0 %v919, 124
    %v928 = vpop.permute.xlu0 %927
    %929 = vrot.lane.b32.xlu0 %v920, 124
    %v930 = vpop.permute.xlu0 %929
    %931 = vrot.lane.b32.xlu0 %v921, 124
    %v932 = vpop.permute.xlu0 %931
    %933 = vrot.lane.b32.xlu0 %v922, 124
    %v934 = vpop.permute.xlu0 %933
    %935 = vrot.lane.b32.xlu0 %v923, 124
    %v936 = vpop.permute.xlu0 %935
    %937 = vrot.lane.b32.xlu0 %v924, 124
    %v938 = vpop.permute.xlu0 %937
    %939 = vrot.lane.b32.xlu0 %v925, 124
    %v940 = vpop.permute.xlu0 %939
    %941 = vrot.lane.b32.xlu0 %v926, 124
    %v942 = vpop.permute.xlu0 %941
    %vm951 = vcmask 109664
    %952 = vst.msk [vmem:[#allocation3] sm:$0xf] %vm951, %v928
    %953 = vst.msk [vmem:[#allocation3 + $0x4] sm:$0xf] %vm951, %v930
    %954 = vst.msk [vmem:[#allocation3 + $0x8] sm:$0xf] %vm951, %v932
    %955 = vst.msk [vmem:[#allocation3 + $0xc] sm:$0xf] %vm951, %v934
    %956 = vst.msk [vmem:[#allocation3 + $0x10] sm:$0xf] %vm951, %v936
    %957 = vst.msk [vmem:[#allocation3 + $0x14] sm:$0xf] %vm951, %v938
    %958 = vst.msk [vmem:[#allocation3 + $0x18] sm:$0xf] %vm951, %v940
    %959 = vst.msk [vmem:[#allocation3 + $0x1c] sm:$0xf] %vm951, %v942
    %v960 = vld [vmem:[#allocation2] sm:$0xff]
    %v961 = vld [vmem:[#allocation2 + $0x8] sm:$0xff]
    %v962 = vld [vmem:[#allocation2 + $0x10] sm:$0xff]
    %v963 = vld [vmem:[#allocation2 + $0x18] sm:$0xff]
    %v964 = vld [vmem:[#allocation2 + $0x20] sm:$0xff]
    %v965 = vld [vmem:[#allocation2 + $0x28] sm:$0xff]
    %v966 = vld [vmem:[#allocation2 + $0x30] sm:$0xff]
    %v967 = vld [vmem:[#allocation2 + $0x38] sm:$0xff]
    %976 = vrot.lane.b32.xlu0 %v960, 126
    %v977 = vpop.permute.xlu0 %976
    %978 = vrot.lane.b32.xlu0 %v961, 126
    %v979 = vpop.permute.xlu0 %978
    %980 = vrot.lane.b32.xlu0 %v962, 126
    %v981 = vpop.permute.xlu0 %980
    %982 = vrot.lane.b32.xlu0 %v963, 126
    %v983 = vpop.permute.xlu0 %982
    %984 = vrot.lane.b32.xlu0 %v964, 126
    %v985 = vpop.permute.xlu0 %984
    %986 = vrot.lane.b32.xlu0 %v965, 126
    %v987 = vpop.permute.xlu0 %986
    %988 = vrot.lane.b32.xlu0 %v966, 126
    %v989 = vpop.permute.xlu0 %988
    %990 = vrot.lane.b32.xlu0 %v967, 126
    %v991 = vpop.permute.xlu0 %990
    %v1000 = vmax.f32 %v960, %v977
    %v1001 = vmax.f32 %v961, %v979
    %v1002 = vmax.f32 %v962, %v981
    %v1003 = vmax.f32 %v963, %v983
    %v1004 = vmax.f32 %v964, %v985
    %v1005 = vmax.f32 %v965, %v987
    %v1006 = vmax.f32 %v966, %v989
    %v1007 = vmax.f32 %v967, %v991
    %1008 = vrot.lane.b32.xlu0 %v960, 124
    %v1009 = vpop.permute.xlu0 %1008
    %1010 = vrot.lane.b32.xlu0 %v961, 124
    %v1011 = vpop.permute.xlu0 %1010
    %1012 = vrot.lane.b32.xlu0 %v962, 124
    %v1013 = vpop.permute.xlu0 %1012
    %1014 = vrot.lane.b32.xlu0 %v963, 124
    %v1015 = vpop.permute.xlu0 %1014
    %1016 = vrot.lane.b32.xlu0 %v964, 124
    %v1017 = vpop.permute.xlu0 %1016
    %1018 = vrot.lane.b32.xlu0 %v965, 124
    %v1019 = vpop.permute.xlu0 %1018
    %1020 = vrot.lane.b32.xlu0 %v966, 124
    %v1021 = vpop.permute.xlu0 %1020
    %1022 = vrot.lane.b32.xlu0 %v967, 124
    %v1023 = vpop.permute.xlu0 %1022
    %v1032 = vmax.f32 %v1000, %v1009
    %v1033 = vmax.f32 %v1001, %v1011
    %v1034 = vmax.f32 %v1002, %v1013
    %v1035 = vmax.f32 %v1003, %v1015
    %v1036 = vmax.f32 %v1004, %v1017
    %v1037 = vmax.f32 %v1005, %v1019
    %v1038 = vmax.f32 %v1006, %v1021
    %v1039 = vmax.f32 %v1007, %v1023
    %v1040 = vpack.c.bf16 %v1033, %v1032
    %v1041 = vpack.c.bf16 %v1035, %v1034
    %v1042 = vpack.c.bf16 %v1037, %v1036
    %v1043 = vpack.c.bf16 %v1039, %v1038
    %v1048 = vunpack.c.l.b16 %v1040
    %v1049 = vunpack.c.h.b16 %v1040
    %v1050 = vunpack.c.l.b16 %v1041
    %v1051 = vunpack.c.h.b16 %v1041
    %v1052 = vunpack.c.l.b16 %v1042
    %v1053 = vunpack.c.h.b16 %v1042
    %v1054 = vunpack.c.l.b16 %v1043
    %v1055 = vunpack.c.h.b16 %v1043
    %v1056 = vpack.c.b16 %v1048, %v1048
    %v1057 = vpack.c.b16 %v1049, %v1049
    %v1058 = vpack.c.b16 %v1050, %v1050
    %v1059 = vpack.c.b16 %v1051, %v1051
    %v1060 = vpack.c.b16 %v1052, %v1052
    %v1061 = vpack.c.b16 %v1053, %v1053
    %v1062 = vpack.c.b16 %v1054, %v1054
    %v1063 = vpack.c.b16 %v1055, %v1055
    %1064 = vrot.lane.b32.xlu0 %v1056, 122
    %v1065 = vpop.permute.xlu0 %1064
    %1066 = vrot.lane.b32.xlu0 %v1057, 122
    %v1067 = vpop.permute.xlu0 %1066
    %1068 = vrot.lane.b32.xlu0 %v1058, 122
    %v1069 = vpop.permute.xlu0 %1068
    %1070 = vrot.lane.b32.xlu0 %v1059, 122
    %v1071 = vpop.permute.xlu0 %1070
    %1072 = vrot.lane.b32.xlu0 %v1060, 122
    %v1073 = vpop.permute.xlu0 %1072
    %1074 = vrot.lane.b32.xlu0 %v1061, 122
    %v1075 = vpop.permute.xlu0 %1074
    %1076 = vrot.lane.b32.xlu0 %v1062, 122
    %v1077 = vpop.permute.xlu0 %1076
    %1078 = vrot.lane.b32.xlu0 %v1063, 122
    %v1079 = vpop.permute.xlu0 %1078
    %vm1088 = vcmask 126064
    %1089 = vst.msk [vmem:[#allocation3] sm:$0xf] %vm1088, %v1065
    %1090 = vst.msk [vmem:[#allocation3 + $0x4] sm:$0xf] %vm1088, %v1067
    %1091 = vst.msk [vmem:[#allocation3 + $0x8] sm:$0xf] %vm1088, %v1069
    %1092 = vst.msk [vmem:[#allocation3 + $0xc] sm:$0xf] %vm1088, %v1071
    %1093 = vst.msk [vmem:[#allocation3 + $0x10] sm:$0xf] %vm1088, %v1073
    %1094 = vst.msk [vmem:[#allocation3 + $0x14] sm:$0xf] %vm1088, %v1075
    %1095 = vst.msk [vmem:[#allocation3 + $0x18] sm:$0xf] %vm1088, %v1077
    %1096 = vst.msk [vmem:[#allocation3 + $0x1c] sm:$0xf] %vm1088, %v1079
    %v1097 = vld [vmem:[#allocation2] sm:$0xff]
    %v1098 = vld [vmem:[#allocation2 + $0x8] sm:$0xff]
    %v1099 = vld [vmem:[#allocation2 + $0x10] sm:$0xff]
    %v1100 = vld [vmem:[#allocation2 + $0x18] sm:$0xff]
    %v1101 = vld [vmem:[#allocation2 + $0x20] sm:$0xff]
    %v1102 = vld [vmem:[#allocation2 + $0x28] sm:$0xff]
    %v1103 = vld [vmem:[#allocation2 + $0x30] sm:$0xff]
    %v1104 = vld [vmem:[#allocation2 + $0x38] sm:$0xff]
    %1113 = vrot.lane.b32.xlu0 %v1097, 126
    %v1114 = vpop.permute.xlu0 %1113
    %1115 = vrot.lane.b32.xlu0 %v1098, 126
    %v1116 = vpop.permute.xlu0 %1115
    %1117 = vrot.lane.b32.xlu0 %v1099, 126
    %v1118 = vpop.permute.xlu0 %1117
    %1119 = vrot.lane.b32.xlu0 %v1100, 126
    %v1120 = vpop.permute.xlu0 %1119
    %1121 = vrot.lane.b32.xlu0 %v1101, 126
    %v1122 = vpop.permute.xlu0 %1121
    %1123 = vrot.lane.b32.xlu0 %v1102, 126
    %v1124 = vpop.permute.xlu0 %1123
    %1125 = vrot.lane.b32.xlu0 %v1103, 126
    %v1126 = vpop.permute.xlu0 %1125
    %1127 = vrot.lane.b32.xlu0 %v1104, 126
    %v1128 = vpop.permute.xlu0 %1127
    %v1137 = vmax.f32 %v1097, %v1114
    %v1138 = vmax.f32 %v1098, %v1116
    %v1139 = vmax.f32 %v1099, %v1118
    %v1140 = vmax.f32 %v1100, %v1120
    %v1141 = vmax.f32 %v1101, %v1122
    %v1142 = vmax.f32 %v1102, %v1124
    %v1143 = vmax.f32 %v1103, %v1126
    %v1144 = vmax.f32 %v1104, %v1128
    %1145 = vrot.lane.b32.xlu0 %v1097, 124
    %v1146 = vpop.permute.xlu0 %1145
    %1147 = vrot.lane.b32.xlu0 %v1098, 124
    %v1148 = vpop.permute.xlu0 %1147
    %1149 = vrot.lane.b32.xlu0 %v1099, 124
    %v1150 = vpop.permute.xlu0 %1149
    %1151 = vrot.lane.b32.xlu0 %v1100, 124
    %v1152 = vpop.permute.xlu0 %1151
    %1153 = vrot.lane.b32.xlu0 %v1101, 124
    %v1154 = vpop.permute.xlu0 %1153
    %1155 = vrot.lane.b32.xlu0 %v1102, 124
    %v1156 = vpop.permute.xlu0 %1155
    %1157 = vrot.lane.b32.xlu0 %v1103, 124
    %v1158 = vpop.permute.xlu0 %1157
    %1159 = vrot.lane.b32.xlu0 %v1104, 124
    %v1160 = vpop.permute.xlu0 %1159
    %v1169 = vmax.f32 %v1137, %v1146
    %v1170 = vmax.f32 %v1138, %v1148
    %v1171 = vmax.f32 %v1139, %v1150
    %v1172 = vmax.f32 %v1140, %v1152
    %v1173 = vmax.f32 %v1141, %v1154
    %v1174 = vmax.f32 %v1142, %v1156
    %v1175 = vmax.f32 %v1143, %v1158
    %v1176 = vmax.f32 %v1144, %v1160
    %v1177 = vpack.c.bf16 %v1170, %v1169
    %v1178 = vpack.c.bf16 %v1172, %v1171
    %v1179 = vpack.c.bf16 %v1174, %v1173
    %v1180 = vpack.c.bf16 %v1176, %v1175
    %v1185 = vunpack.c.l.b16 %v1177
    %v1186 = vunpack.c.h.b16 %v1177
    %v1187 = vunpack.c.l.b16 %v1178
    %v1188 = vunpack.c.h.b16 %v1178
    %v1189 = vunpack.c.l.b16 %v1179
    %v1190 = vunpack.c.h.b16 %v1179
    %v1191 = vunpack.c.l.b16 %v1180
    %v1192 = vunpack.c.h.b16 %v1180
    %v1193 = vpack.c.b16 %v1185, %v1185
    %v1194 = vpack.c.b16 %v1186, %v1186
    %v1195 = vpack.c.b16 %v1187, %v1187
    %v1196 = vpack.c.b16 %v1188, %v1188
    %v1197 = vpack.c.b16 %v1189, %v1189
    %v1198 = vpack.c.b16 %v1190, %v1190
    %v1199 = vpack.c.b16 %v1191, %v1191
    %v1200 = vpack.c.b16 %v1192, %v1192
    %1201 = vrot.lane.b32.xlu0 %v1193, 120
    %v1202 = vpop.permute.xlu0 %1201
    %1203 = vrot.lane.b32.xlu0 %v1194, 120
    %v1204 = vpop.permute.xlu0 %1203
    %1205 = vrot.lane.b32.xlu0 %v1195, 120
    %v1206 = vpop.permute.xlu0 %1205
    %1207 = vrot.lane.b32.xlu0 %v1196, 120
    %v1208 = vpop.permute.xlu0 %1207
    %1209 = vrot.lane.b32.xlu0 %v1197, 120
    %v1210 = vpop.permute.xlu0 %1209
    %1211 = vrot.lane.b32.xlu0 %v1198, 120
    %v1212 = vpop.permute.xlu0 %1211
    %1213 = vrot.lane.b32.xlu0 %v1199, 120
    %v1214 = vpop.permute.xlu0 %1213
    %1215 = vrot.lane.b32.xlu0 %v1200, 120
    %v1216 = vpop.permute.xlu0 %1215
    %vm1225 = vcmask 142464
    %1226 = vst.msk [vmem:[#allocation3] sm:$0xf] %vm1225, %v1202
    %1227 = vst.msk [vmem:[#allocation3 + $0x4] sm:$0xf] %vm1225, %v1204
    %1228 = vst.msk [vmem:[#allocation3 + $0x8] sm:$0xf] %vm1225, %v1206
    %1229 = vst.msk [vmem:[#allocation3 + $0xc] sm:$0xf] %vm1225, %v1208
    %1230 = vst.msk [vmem:[#allocation3 + $0x10] sm:$0xf] %vm1225, %v1210
    %1231 = vst.msk [vmem:[#allocation3 + $0x14] sm:$0xf] %vm1225, %v1212
    %1232 = vst.msk [vmem:[#allocation3 + $0x18] sm:$0xf] %vm1225, %v1214
    %1233 = vst.msk [vmem:[#allocation3 + $0x1c] sm:$0xf] %vm1225, %v1216
    %v1234 = vld [vmem:[#allocation2] sm:$0xff]
    %v1235 = vld [vmem:[#allocation2 + $0x8] sm:$0xff]
    %v1236 = vld [vmem:[#allocation2 + $0x10] sm:$0xff]
    %v1237 = vld [vmem:[#allocation2 + $0x18] sm:$0xff]
    %v1238 = vld [vmem:[#allocation2 + $0x20] sm:$0xff]
    %v1239 = vld [vmem:[#allocation2 + $0x28] sm:$0xff]
    %v1240 = vld [vmem:[#allocation2 + $0x30] sm:$0xff]
    %v1241 = vld [vmem:[#allocation2 + $0x38] sm:$0xff]
    %1250 = vrot.lane.b32.xlu0 %v1234, 126
    %v1251 = vpop.permute.xlu0 %1250
    %1252 = vrot.lane.b32.xlu0 %v1235, 126
    %v1253 = vpop.permute.xlu0 %1252
    %1254 = vrot.lane.b32.xlu0 %v1236, 126
    %v1255 = vpop.permute.xlu0 %1254
    %1256 = vrot.lane.b32.xlu0 %v1237, 126
    %v1257 = vpop.permute.xlu0 %1256
    %1258 = vrot.lane.b32.xlu0 %v1238, 126
    %v1259 = vpop.permute.xlu0 %1258
    %1260 = vrot.lane.b32.xlu0 %v1239, 126
    %v1261 = vpop.permute.xlu0 %1260
    %1262 = vrot.lane.b32.xlu0 %v1240, 126
    %v1263 = vpop.permute.xlu0 %1262
    %1264 = vrot.lane.b32.xlu0 %v1241, 126
    %v1265 = vpop.permute.xlu0 %1264
    %v1274 = vmax.f32 %v1234, %v1251
    %v1275 = vmax.f32 %v1235, %v1253
    %v1276 = vmax.f32 %v1236, %v1255
    %v1277 = vmax.f32 %v1237, %v1257
    %v1278 = vmax.f32 %v1238, %v1259
    %v1279 = vmax.f32 %v1239, %v1261
    %v1280 = vmax.f32 %v1240, %v1263
    %v1281 = vmax.f32 %v1241, %v1265
    %1282 = vrot.lane.b32.xlu0 %v1234, 124
    %v1283 = vpop.permute.xlu0 %1282
    %1284 = vrot.lane.b32.xlu0 %v1235, 124
    %v1285 = vpop.permute.xlu0 %1284
    %1286 = vrot.lane.b32.xlu0 %v1236, 124
    %v1287 = vpop.permute.xlu0 %1286
    %1288 = vrot.lane.b32.xlu0 %v1237, 124
    %v1289 = vpop.permute.xlu0 %1288
    %1290 = vrot.lane.b32.xlu0 %v1238, 124
    %v1291 = vpop.permute.xlu0 %1290
    %1292 = vrot.lane.b32.xlu0 %v1239, 124
    %v1293 = vpop.permute.xlu0 %1292
    %1294 = vrot.lane.b32.xlu0 %v1240, 124
    %v1295 = vpop.permute.xlu0 %1294
    %1296 = vrot.lane.b32.xlu0 %v1241, 124
    %v1297 = vpop.permute.xlu0 %1296
    %v1306 = vmax.f32 %v1274, %v1283
    %v1307 = vmax.f32 %v1275, %v1285
    %v1308 = vmax.f32 %v1276, %v1287
    %v1309 = vmax.f32 %v1277, %v1289
    %v1310 = vmax.f32 %v1278, %v1291
    %v1311 = vmax.f32 %v1279, %v1293
    %v1312 = vmax.f32 %v1280, %v1295
    %v1313 = vmax.f32 %v1281, %v1297
    %v1314 = vpack.c.bf16 %v1307, %v1306
    %v1315 = vpack.c.bf16 %v1309, %v1308
    %v1316 = vpack.c.bf16 %v1311, %v1310
    %v1317 = vpack.c.bf16 %v1313, %v1312
    %v1322 = vunpack.c.l.b16 %v1314
    %v1323 = vunpack.c.h.b16 %v1314
    %v1324 = vunpack.c.l.b16 %v1315
    %v1325 = vunpack.c.h.b16 %v1315
    %v1326 = vunpack.c.l.b16 %v1316
    %v1327 = vunpack.c.h.b16 %v1316
    %v1328 = vunpack.c.l.b16 %v1317
    %v1329 = vunpack.c.h.b16 %v1317
    %v1330 = vpack.c.b16 %v1322, %v1322
    %v1331 = vpack.c.b16 %v1323, %v1323
    %v1332 = vpack.c.b16 %v1324, %v1324
    %v1333 = vpack.c.b16 %v1325, %v1325
    %v1334 = vpack.c.b16 %v1326, %v1326
    %v1335 = vpack.c.b16 %v1327, %v1327
    %v1336 = vpack.c.b16 %v1328, %v1328
    %v1337 = vpack.c.b16 %v1329, %v1329
    %1338 = vrot.lane.b32.xlu0 %v1330, 118
    %v1339 = vpop.permute.xlu0 %1338
    %1340 = vrot.lane.b32.xlu0 %v1331, 118
    %v1341 = vpop.permute.xlu0 %1340
    %1342 = vrot.lane.b32.xlu0 %v1332, 118
    %v1343 = vpop.permute.xlu0 %1342
    %1344 = vrot.lane.b32.xlu0 %v1333, 118
    %v1345 = vpop.permute.xlu0 %1344
    %1346 = vrot.lane.b32.xlu0 %v1334, 118
    %v1347 = vpop.permute.xlu0 %1346
    %1348 = vrot.lane.b32.xlu0 %v1335, 118
    %v1349 = vpop.permute.xlu0 %1348
    %1350 = vrot.lane.b32.xlu0 %v1336, 118
    %v1351 = vpop.permute.xlu0 %1350
    %1352 = vrot.lane.b32.xlu0 %v1337, 118
    %v1353 = vpop.permute.xlu0 %1352
    %vm1362 = vcmask 158864
    %1363 = vst.msk [vmem:[#allocation3] sm:$0xf] %vm1362, %v1339
    %1364 = vst.msk [vmem:[#allocation3 + $0x4] sm:$0xf] %vm1362, %v1341
    %1365 = vst.msk [vmem:[#allocation3 + $0x8] sm:$0xf] %vm1362, %v1343
    %1366 = vst.msk [vmem:[#allocation3 + $0xc] sm:$0xf] %vm1362, %v1345
    %1367 = vst.msk [vmem:[#allocation3 + $0x10] sm:$0xf] %vm1362, %v1347
    %1368 = vst.msk [vmem:[#allocation3 + $0x14] sm:$0xf] %vm1362, %v1349
    %1369 = vst.msk [vmem:[#allocation3 + $0x18] sm:$0xf] %vm1362, %v1351
    %1370 = vst.msk [vmem:[#allocation3 + $0x1c] sm:$0xf] %vm1362, %v1353
    loop: start=0, step=1, limit=4
    $region42: #{calanet_forward.1} parent=1 // loop_pre_header
      _
    $region43: #{calanet_forward.1} parent=1 // loop_header
      %s1372 = sphi 0, %s1376
      %p1373 = scmp.ge.s32.totalorder %s1372, 4
    $region44: #{calanet_forward.1} parent=1 // loop_header_branch
      %1375 = sbr.rel (%p1373) target = $region48
    $region45: #{calanet_forward.1} parent=1 // loop_body
      %v1377 = vld [vmem:[#allocation3] sm:$0xf]
      %v1378 = vld [vmem:[#allocation3 + $0x4] sm:$0xf]
      %v1379 = vld [vmem:[#allocation3 + $0x8] sm:$0xf]
      %v1380 = vld [vmem:[#allocation3 + $0xc] sm:$0xf]
      %v1381 = vld [vmem:[#allocation3 + $0x10] sm:$0xf]
      %v1382 = vld [vmem:[#allocation3 + $0x14] sm:$0xf]
      %v1383 = vld [vmem:[#allocation3 + $0x18] sm:$0xf]
      %v1384 = vld [vmem:[#allocation3 + $0x1c] sm:$0xf]
      %v1393 = vunpack.c.l.b16 %v1377
      %v1394 = vunpack.c.l.b16 %v1378
      %v1395 = vunpack.c.l.b16 %v1379
      %v1396 = vunpack.c.l.b16 %v1380
      %v1397 = vunpack.c.l.b16 %v1381
      %v1398 = vunpack.c.l.b16 %v1382
      %v1399 = vunpack.c.l.b16 %v1383
      %v1400 = vunpack.c.l.b16 %v1384
      %v1401 = vpack.c.b16 %v1394, %v1393
      %v1402 = vpack.c.b16 %v1396, %v1395
      %v1403 = vpack.c.b16 %v1398, %v1397
      %v1404 = vpack.c.b16 %v1400, %v1399
      %1409 = vrot.lane.b32.xlu0 %v1401, 126
      %v1410 = vpop.permute.xlu0 %1409
      %1411 = vrot.lane.b32.xlu0 %v1402, 126
      %v1412 = vpop.permute.xlu0 %1411
      %1413 = vrot.lane.b32.xlu0 %v1403, 126
      %v1414 = vpop.permute.xlu0 %1413
      %1415 = vrot.lane.b32.xlu0 %v1404, 126
      %v1416 = vpop.permute.xlu0 %1415
      %1421 = vrot.lane.b32.xlu0 %v1401, 124
      %v1422 = vpop.permute.xlu0 %1421
      %1423 = vrot.lane.b32.xlu0 %v1402, 124
      %v1424 = vpop.permute.xlu0 %1423
      %1425 = vrot.lane.b32.xlu0 %v1403, 124
      %v1426 = vpop.permute.xlu0 %1425
      %1427 = vrot.lane.b32.xlu0 %v1404, 124
      %v1428 = vpop.permute.xlu0 %1427
      %1433 = vrot.lane.b32.xlu0 %v1401, 122
      %v1434 = vpop.permute.xlu0 %1433
      %1435 = vrot.lane.b32.xlu0 %v1402, 122
      %v1436 = vpop.permute.xlu0 %1435
      %1437 = vrot.lane.b32.xlu0 %v1403, 122
      %v1438 = vpop.permute.xlu0 %1437
      %1439 = vrot.lane.b32.xlu0 %v1404, 122
      %v1440 = vpop.permute.xlu0 %1439
      %1445 = vrot.lane.b32.xlu0 %v1401, 120
      %v1446 = vpop.permute.xlu0 %1445
      %1447 = vrot.lane.b32.xlu0 %v1402, 120
      %v1448 = vpop.permute.xlu0 %1447
      %1449 = vrot.lane.b32.xlu0 %v1403, 120
      %v1450 = vpop.permute.xlu0 %1449
      %1451 = vrot.lane.b32.xlu0 %v1404, 120
      %v1452 = vpop.permute.xlu0 %1451
      %s1457 = smul.u32 %s1372, 24
      %s1458 = smul.addr %s1457, 4
      %s1459 = scalar_lea.vmem %s3, %s1458
      %v1460 = vld [vmem:[%s1459] sm:$0xff]
      %v1461 = vld [vmem:[%s1459 + $0x8] sm:$0xf]
      %v1462 = vld [vmem:[%s1459 + $0xc] sm:$0xff]
      %v1463 = vld [vmem:[%s1459 + $0x14] sm:$0xf]
      %v1464 = vld [vmem:[%s1459 + $0x18] sm:$0xff]
      %v1465 = vld [vmem:[%s1459 + $0x20] sm:$0xf]
      %v1466 = vld [vmem:[%s1459 + $0x24] sm:$0xff]
      %v1467 = vld [vmem:[%s1459 + $0x2c] sm:$0xf]
      %v1468 = vld [vmem:[%s1459 + $0x30] sm:$0xff]
      %v1469 = vld [vmem:[%s1459 + $0x38] sm:$0xf]
      %v1470 = vld [vmem:[%s1459 + $0x3c] sm:$0xff]
      %v1471 = vld [vmem:[%s1459 + $0x44] sm:$0xf]
      %v1472 = vld [vmem:[%s1459 + $0x48] sm:$0xff]
      %v1473 = vld [vmem:[%s1459 + $0x50] sm:$0xf]
      %v1474 = vld [vmem:[%s1459 + $0x54] sm:$0xff]
      %v1475 = vld [vmem:[%s1459 + $0x5c] sm:$0xf]
      %s1476 = smul.u32 %s1372, 64
      %s1477 = scalar_lea.vmem %s4, %s1476
      %v1478 = vld [vmem:[%s1477] sm:$0xff]
      %v1479 = vld [vmem:[%s1477 + $0x8] sm:$0xff]
      %v1480 = vld [vmem:[%s1477 + $0x10] sm:$0xff]
      %v1481 = vld [vmem:[%s1477 + $0x18] sm:$0xff]
      %v1482 = vld [vmem:[%s1477 + $0x20] sm:$0xff]
      %v1483 = vld [vmem:[%s1477 + $0x28] sm:$0xff]
      %v1484 = vld [vmem:[%s1477 + $0x30] sm:$0xff]
      %v1485 = vld [vmem:[%s1477 + $0x38] sm:$0xff]
      %1487 = vset.pattern.permute.xlu0 0
      %1488 = vperm.xlu0 %1487, %v1478
      %v1489 = vpop.permute.xlu0 %1488
      %1492 = vset.pattern.permute.xlu0 0
      %1493 = vperm.xlu0 %1492, %v1479
      %v1494 = vpop.permute.xlu0 %1493
      %1497 = vset.pattern.permute.xlu0 0
      %1498 = vperm.xlu0 %1497, %v1480
      %v1499 = vpop.permute.xlu0 %1498
      %1502 = vset.pattern.permute.xlu0 0
      %1503 = vperm.xlu0 %1502, %v1481
      %v1504 = vpop.permute.xlu0 %1503
      %1507 = vset.pattern.permute.xlu0 0
      %1508 = vperm.xlu0 %1507, %v1482
      %v1509 = vpop.permute.xlu0 %1508
      %1512 = vset.pattern.permute.xlu0 0
      %1513 = vperm.xlu0 %1512, %v1483
      %v1514 = vpop.permute.xlu0 %1513
      %1517 = vset.pattern.permute.xlu0 0
      %1518 = vperm.xlu0 %1517, %v1484
      %v1519 = vpop.permute.xlu0 %1518
      %1522 = vset.pattern.permute.xlu0 0
      %1523 = vperm.xlu0 %1522, %v1485
      %v1524 = vpop.permute.xlu0 %1523
      %v1542 = vunpack.c.l.b16 %v1460
      %v1543 = vunpack.c.h.b16 %v1460
      %v1544 = vunpack.c.l.b16 %v1461
      %v1545 = vunpack.c.l.b16 %v1462
      %v1546 = vunpack.c.h.b16 %v1462
      %v1547 = vunpack.c.l.b16 %v1463
      %v1548 = vunpack.c.l.b16 %v1464
      %v1549 = vunpack.c.h.b16 %v1464
      %v1550 = vunpack.c.l.b16 %v1465
      %v1551 = vunpack.c.l.b16 %v1466
      %v1552 = vunpack.c.h.b16 %v1466
      %v1553 = vunpack.c.l.b16 %v1467
      %v1554 = vunpack.c.l.b16 %v1468
      %v1555 = vunpack.c.h.b16 %v1468
      %v1556 = vunpack.c.l.b16 %v1469
      %v1557 = vunpack.c.l.b16 %v1470
      %v1558 = vunpack.c.h.b16 %v1470
      %v1559 = vunpack.c.l.b16 %v1471
      %v1560 = vunpack.c.l.b16 %v1472
      %v1561 = vunpack.c.h.b16 %v1472
      %v1562 = vunpack.c.l.b16 %v1473
      %v1563 = vunpack.c.l.b16 %v1474
      %v1564 = vunpack.c.h.b16 %v1474
      %v1565 = vunpack.c.l.b16 %v1475
      %v1566 = vpack.c.b16 %v1545, %v1542
      %v1567 = vpack.c.b16 %v1546, %v1543
      %v1568 = vpack.c.b16 %v1547, %v1544
      %v1569 = vpack.c.b16 %v1551, %v1548
      %v1570 = vpack.c.b16 %v1552, %v1549
      %v1571 = vpack.c.b16 %v1553, %v1550
      %v1572 = vpack.c.b16 %v1557, %v1554
      %v1573 = vpack.c.b16 %v1558, %v1555
      %v1574 = vpack.c.b16 %v1559, %v1556
      %v1575 = vpack.c.b16 %v1563, %v1560
      %v1576 = vpack.c.b16 %v1564, %v1561
      %v1577 = vpack.c.b16 %v1565, %v1562
      %vm1586 = vcmask 523264
      %v1588 = vsel %vm1586, %v1568, 0
      %v1591 = vsel %vm1586, %v1571, 0
      %v1594 = vsel %vm1586, %v1574, 0
      %v1597 = vsel %vm1586, %v1577, 0
      %1599 = vmatprep.subr.bf16.mxu0 0
      %1600 = vmatpush1.bf16.msra.mxu0 %v1416
      %1601 = vmatprep.subr.bf16.mxu0 0
      %1602 = vmatpush1.bf16.msra.mxu0 %v1414
      %1603 = vmatprep.subr.bf16.mxu0 0
      %1604 = vmatpush1.bf16.msra.mxu0 %v1412
      %1605 = vmatprep.subr.bf16.mxu0 0
      %1606 = vmatpush1.bf16.msra.mxu0 %v1410
      %1607 = vmatprep.subr.bf16.mxu0 0
      %1608 = vmatpush1.bf16.msra.mxu0 %v1404
      %1609 = vmatprep.subr.bf16.mxu0 0
      %1610 = vmatpush1.bf16.msra.mxu0 %v1403
      %1611 = vmatprep.subr.bf16.mxu0 0
      %1612 = vmatpush1.bf16.msra.mxu0 %v1402
      %1613 = vmatprep.subr.bf16.mxu0 0
      %1614 = vmatpush1.bf16.msra.mxu0 %v1401
      %1615 = vmatprep.subr.bf16.mxu0 0
      %1616 = vmatpush2.bf16.msra.mxu0 %v1440
      %1617 = vmatprep.subr.bf16.mxu0 0
      %1618 = vmatpush2.bf16.msra.mxu0 %v1438
      %1619 = vmatprep.subr.bf16.mxu0 0
      %1620 = vmatpush2.bf16.msra.mxu0 %v1436
      %1621 = vmatprep.subr.bf16.mxu0 0
      %1622 = vmatpush2.bf16.msra.mxu0 %v1434
      %1623 = vmatprep.subr.bf16.mxu0 0
      %1624 = vmatpush2.bf16.msra.mxu0 %v1428
      %1625 = vmatprep.subr.bf16.mxu0 0
      %1626 = vmatpush2.bf16.msra.mxu0 %v1426
      %1627 = vmatprep.subr.bf16.mxu0 0
      %1628 = vmatpush2.bf16.msra.mxu0 %v1424
      %1629 = vmatprep.subr.bf16.mxu0 0
      %1630 = vmatpush2.bf16.msra.mxu0 %v1422
      %1631 = vmatprep.mubr.bf16.mxu0 %v1567
      %1632 = vmatmul.mubr.bf16.gmra.mxu0 %v1566
      %v1633 = vpop.f32.mrf.mxu0
      %v1634 = vadd.f32 %v1489, %v1633
      %v1635 = vpop.f32.mrf.mxu0
      %v1636 = vpop.f32.mrf.mxu0
      %v1637 = vadd.f32 %v1494, %v1636
      %v1638 = vpop.f32.mrf.mxu0
      %1639 = vmatprep.mubr.bf16.mxu0 %v1570
      %1640 = vmatmul.mubr.bf16.gmra.mxu0 %v1569
      %v1641 = vpop.f32.mrf.mxu0
      %v1642 = vadd.f32 %v1499, %v1641
      %v1643 = vpop.f32.mrf.mxu0
      %v1644 = vpop.f32.mrf.mxu0
      %v1645 = vadd.f32 %v1504, %v1644
      %v1646 = vpop.f32.mrf.mxu0
      %1647 = vmatprep.mubr.bf16.mxu0 %v1573
      %1648 = vmatmul.mubr.bf16.gmra.mxu0 %v1572
      %v1649 = vpop.f32.mrf.mxu0
      %v1650 = vadd.f32 %v1509, %v1649
      %v1651 = vpop.f32.mrf.mxu0
      %v1652 = vpop.f32.mrf.mxu0
      %v1653 = vadd.f32 %v1514, %v1652
      %v1654 = vpop.f32.mrf.mxu0
      %1655 = vmatprep.mubr.bf16.mxu0 %v1576
      %1656 = vmatmul.mubr.bf16.gmra.mxu0 %v1575
      %v1657 = vpop.f32.mrf.mxu0
      %v1658 = vadd.f32 %v1519, %v1657
      %v1659 = vpop.f32.mrf.mxu0
      %v1660 = vpop.f32.mrf.mxu0
      %v1661 = vadd.f32 %v1524, %v1660
      %v1662 = vpop.f32.mrf.mxu0
      %1663 = vdwg.mxu0
      %1664 = vmatprep.subr.bf16.mxu0 0
      %1665 = vmatpush1.bf16.msra.mxu0 0
      %1666 = vmatprep.subr.bf16.mxu0 0
      %1667 = vmatpush1.bf16.msra.mxu0 0
      %1668 = vmatprep.subr.bf16.mxu0 0
      %1669 = vmatpush1.bf16.msra.mxu0 0
      %1670 = vmatprep.subr.bf16.mxu0 0
      %1671 = vmatpush1.bf16.msra.mxu0 0
      %1672 = vmatprep.subr.bf16.mxu0 0
      %1673 = vmatpush1.bf16.msra.mxu0 %v1452
      %1674 = vmatprep.subr.bf16.mxu0 0
      %1675 = vmatpush1.bf16.msra.mxu0 %v1450
      %1676 = vmatprep.subr.bf16.mxu0 0
      %1677 = vmatpush1.bf16.msra.mxu0 %v1448
      %1678 = vmatprep.subr.bf16.mxu0 0
      %1679 = vmatpush1.bf16.msra.mxu0 %v1446
      %1680 = vmatprep.subr.bf16.mxu0 0
      %1681 = vmatpush2.bf16.msra.mxu0 0
      %1682 = vmatprep.subr.bf16.mxu0 0
      %1683 = vmatpush2.bf16.msra.mxu0 0
      %1684 = vmatprep.subr.bf16.mxu0 0
      %1685 = vmatpush2.bf16.msra.mxu0 0
      %1686 = vmatprep.subr.bf16.mxu0 0
      %1687 = vmatpush2.bf16.msra.mxu0 0
      %1688 = vmatprep.subr.bf16.mxu0 0
      %1689 = vmatpush2.bf16.msra.mxu0 0
      %1690 = vmatprep.subr.bf16.mxu0 0
      %1691 = vmatpush2.bf16.msra.mxu0 0
      %1692 = vmatprep.subr.bf16.mxu0 0
      %1693 = vmatpush2.bf16.msra.mxu0 0
      %1694 = vmatprep.subr.bf16.mxu0 0
      %1695 = vmatpush2.bf16.msra.mxu0 0
      %1696 = vmatprep.mubr.bf16.mxu0 0
      %1697 = vmatmul.mubr.bf16.gmra.mxu0 %v1588
      %v1698 = vpop.f32.mrf.mxu0
      %v1699 = vadd.f32 %v1634, %v1698
      %v1700 = vpop.f32.mrf.mxu0
      %v1701 = vpop.f32.mrf.mxu0
      %v1702 = vadd.f32 %v1637, %v1701
      %v1703 = vpop.f32.mrf.mxu0
      %1704 = vmatprep.mubr.bf16.mxu0 0
      %1705 = vmatmul.mubr.bf16.gmra.mxu0 %v1591
      %v1706 = vpop.f32.mrf.mxu0
      %v1707 = vadd.f32 %v1642, %v1706
      %v1708 = vpop.f32.mrf.mxu0
      %v1709 = vpop.f32.mrf.mxu0
      %v1710 = vadd.f32 %v1645, %v1709
      %v1711 = vpop.f32.mrf.mxu0
      %1712 = vmatprep.mubr.bf16.mxu0 0
      %1713 = vmatmul.mubr.bf16.gmra.mxu0 %v1594
      %v1714 = vpop.f32.mrf.mxu0
      %v1715 = vadd.f32 %v1650, %v1714
      %v1716 = vpop.f32.mrf.mxu0
      %v1717 = vpop.f32.mrf.mxu0
      %v1718 = vadd.f32 %v1653, %v1717
      %v1719 = vpop.f32.mrf.mxu0
      %1720 = vmatprep.mubr.bf16.mxu0 0
      %1721 = vmatmul.mubr.bf16.gmra.mxu0 %v1597
      %v1722 = vpop.f32.mrf.mxu0
      %v1723 = vadd.f32 %v1658, %v1722
      %v1724 = vpop.f32.mrf.mxu0
      %v1725 = vpop.f32.mrf.mxu0
      %v1726 = vadd.f32 %v1661, %v1725
      %v1727 = vpop.f32.mrf.mxu0
      %1728 = vdwg.mxu0
      %v1729 = vmax.f32 %v1699, 0.0
      %v1730 = vmax.f32 %v1702, 0.0
      %v1731 = vmax.f32 %v1707, 0.0
      %v1732 = vmax.f32 %v1710, 0.0
      %v1733 = vmax.f32 %v1715, 0.0
      %v1734 = vmax.f32 %v1718, 0.0
      %v1735 = vmax.f32 %v1723, 0.0
      %v1736 = vmax.f32 %v1726, 0.0
      %v1737 = vpack.c.bf16 %v1730, %v1729
      %v1738 = vpack.c.bf16 %v1732, %v1731
      %v1739 = vpack.c.bf16 %v1734, %v1733
      %v1740 = vpack.c.bf16 %v1736, %v1735
      %v1745 = vunpack.c.l.b16 %v1737
      %v1746 = vunpack.c.h.b16 %v1737
      %v1747 = vunpack.c.l.b16 %v1738
      %v1748 = vunpack.c.h.b16 %v1738
      %v1749 = vunpack.c.l.b16 %v1739
      %v1750 = vunpack.c.h.b16 %v1739
      %v1751 = vunpack.c.l.b16 %v1740
      %v1752 = vunpack.c.h.b16 %v1740
      %v1753 = vpack.c.b16 %v1745, %v1745
      %v1754 = vpack.c.b16 %v1746, %v1746
      %v1755 = vpack.c.b16 %v1747, %v1747
      %v1756 = vpack.c.b16 %v1748, %v1748
      %v1757 = vpack.c.b16 %v1749, %v1749
      %v1758 = vpack.c.b16 %v1750, %v1750
      %v1759 = vpack.c.b16 %v1751, %v1751
      %v1760 = vpack.c.b16 %v1752, %v1752
      %1761 = vrot.lane.b32.xlu0 %v1753, 4
      %v1762 = vpop.permute.xlu0 %1761
      %1763 = vrot.lane.b32.xlu0 %v1754, 4
      %v1764 = vpop.permute.xlu0 %1763
      %1765 = vrot.lane.b32.xlu0 %v1755, 4
      %v1766 = vpop.permute.xlu0 %1765
      %1767 = vrot.lane.b32.xlu0 %v1756, 4
      %v1768 = vpop.permute.xlu0 %1767
      %1769 = vrot.lane.b32.xlu0 %v1757, 4
      %v1770 = vpop.permute.xlu0 %1769
      %1771 = vrot.lane.b32.xlu0 %v1758, 4
      %v1772 = vpop.permute.xlu0 %1771
      %1773 = vrot.lane.b32.xlu0 %v1759, 4
      %v1774 = vpop.permute.xlu0 %1773
      %1775 = vrot.lane.b32.xlu0 %v1760, 4
      %v1776 = vpop.permute.xlu0 %1775
      %vm1785 = vcmask 158752
      %1786 = vst.msk [vmem:[#allocation3] sm:$0xf] %vm1785, %v1762
      %1787 = vst.msk [vmem:[#allocation3 + $0x4] sm:$0xf] %vm1785, %v1764
      %1788 = vst.msk [vmem:[#allocation3 + $0x8] sm:$0xf] %vm1785, %v1766
      %1789 = vst.msk [vmem:[#allocation3 + $0xc] sm:$0xf] %vm1785, %v1768
      %1790 = vst.msk [vmem:[#allocation3 + $0x10] sm:$0xf] %vm1785, %v1770
      %1791 = vst.msk [vmem:[#allocation3 + $0x14] sm:$0xf] %vm1785, %v1772
      %1792 = vst.msk [vmem:[#allocation3 + $0x18] sm:$0xf] %vm1785, %v1774
      %1793 = vst.msk [vmem:[#allocation3 + $0x1c] sm:$0xf] %vm1785, %v1776
      %v1794 = vld [vmem:[#allocation3] sm:$0xf]
      %v1795 = vld [vmem:[#allocation3 + $0x4] sm:$0xf]
      %v1796 = vld [vmem:[#allocation3 + $0x8] sm:$0xf]
      %v1797 = vld [vmem:[#allocation3 + $0xc] sm:$0xf]
      %v1798 = vld [vmem:[#allocation3 + $0x10] sm:$0xf]
      %v1799 = vld [vmem:[#allocation3 + $0x14] sm:$0xf]
      %v1800 = vld [vmem:[#allocation3 + $0x18] sm:$0xf]
      %v1801 = vld [vmem:[#allocation3 + $0x1c] sm:$0xf]
      %v1810 = vunpack.c.l.b16 %v1794
      %v1811 = vunpack.c.l.b16 %v1795
      %v1812 = vunpack.c.l.b16 %v1796
      %v1813 = vunpack.c.l.b16 %v1797
      %v1814 = vunpack.c.l.b16 %v1798
      %v1815 = vunpack.c.l.b16 %v1799
      %v1816 = vunpack.c.l.b16 %v1800
      %v1817 = vunpack.c.l.b16 %v1801
      %v1818 = vpack.c.b16 %v1811, %v1810
      %v1819 = vpack.c.b16 %v1813, %v1812
      %v1820 = vpack.c.b16 %v1815, %v1814
      %v1821 = vpack.c.b16 %v1817, %v1816
      %1822 = vrot.lane.b32.xlu0 %v1818, 126
      %v1823 = vpop.permute.xlu0 %1822
      %1824 = vrot.lane.b32.xlu0 %v1819, 126
      %v1825 = vpop.permute.xlu0 %1824
      %1826 = vrot.lane.b32.xlu0 %v1820, 126
      %v1827 = vpop.permute.xlu0 %1826
      %1828 = vrot.lane.b32.xlu0 %v1821, 126
      %v1829 = vpop.permute.xlu0 %1828
      %1830 = vrot.lane.b32.xlu0 %v1818, 124
      %v1831 = vpop.permute.xlu0 %1830
      %1832 = vrot.lane.b32.xlu0 %v1819, 124
      %v1833 = vpop.permute.xlu0 %1832
      %1834 = vrot.lane.b32.xlu0 %v1820, 124
      %v1835 = vpop.permute.xlu0 %1834
      %1836 = vrot.lane.b32.xlu0 %v1821, 124
      %v1837 = vpop.permute.xlu0 %1836
      %1838 = vrot.lane.b32.xlu0 %v1818, 122
      %v1839 = vpop.permute.xlu0 %1838
      %1840 = vrot.lane.b32.xlu0 %v1819, 122
      %v1841 = vpop.permute.xlu0 %1840
      %1842 = vrot.lane.b32.xlu0 %v1820, 122
      %v1843 = vpop.permute.xlu0 %1842
      %1844 = vrot.lane.b32.xlu0 %v1821, 122
      %v1845 = vpop.permute.xlu0 %1844
      %1846 = vrot.lane.b32.xlu0 %v1818, 120
      %v1847 = vpop.permute.xlu0 %1846
      %1848 = vrot.lane.b32.xlu0 %v1819, 120
      %v1849 = vpop.permute.xlu0 %1848
      %1850 = vrot.lane.b32.xlu0 %v1820, 120
      %v1851 = vpop.permute.xlu0 %1850
      %1852 = vrot.lane.b32.xlu0 %v1821, 120
      %v1853 = vpop.permute.xlu0 %1852
      %1854 = vrot.lane.b32.xlu0 %v1818, 118
      %v1855 = vpop.permute.xlu0 %1854
      %1856 = vrot.lane.b32.xlu0 %v1819, 118
      %v1857 = vpop.permute.xlu0 %1856
      %1858 = vrot.lane.b32.xlu0 %v1820, 118
      %v1859 = vpop.permute.xlu0 %1858
      %1860 = vrot.lane.b32.xlu0 %v1821, 118
      %v1861 = vpop.permute.xlu0 %1860
      %1862 = vrot.lane.b32.xlu0 %v1818, 116
      %v1863 = vpop.permute.xlu0 %1862
      %1864 = vrot.lane.b32.xlu0 %v1819, 116
      %v1865 = vpop.permute.xlu0 %1864
      %1866 = vrot.lane.b32.xlu0 %v1820, 116
      %v1867 = vpop.permute.xlu0 %1866
      %1868 = vrot.lane.b32.xlu0 %v1821, 116
      %v1869 = vpop.permute.xlu0 %1868
      %1870 = vrot.lane.b32.xlu0 %v1818, 114
      %v1871 = vpop.permute.xlu0 %1870
      %1872 = vrot.lane.b32.xlu0 %v1819, 114
      %v1873 = vpop.permute.xlu0 %1872
      %1874 = vrot.lane.b32.xlu0 %v1820, 114
      %v1875 = vpop.permute.xlu0 %1874
      %1876 = vrot.lane.b32.xlu0 %v1821, 114
      %v1877 = vpop.permute.xlu0 %1876
      %s1878 = smul.u32 %s1372, 8
      %s1879 = smul.addr %s1878, 4
      %s1880 = scalar_lea.vmem %s5, %s1879
      %v1881 = vld [vmem:[%s1880] sm:$0xff]
      %v1882 = vld [vmem:[%s1880 + $0x8] sm:$0xff]
      %v1883 = vld [vmem:[%s1880 + $0x10] sm:$0xff]
      %v1884 = vld [vmem:[%s1880 + $0x18] sm:$0xff]
      %s1885 = smul.u32 %s1372, 16
      %s1886 = scalar_lea.vmem %s6, %s1885
      %v1887 = vld [vmem:[%s1886] sm:$0xff]
      %v1888 = vld [vmem:[%s1886 + $0x8] sm:$0xff]
      %1890 = vset.pattern.permute.xlu0 0
      %1891 = vperm.xlu0 %1890, %v1887
      %v1892 = vpop.permute.xlu0 %1891
      %1895 = vset.pattern.permute.xlu0 0
      %1896 = vperm.xlu0 %1895, %v1888
      %v1897 = vpop.permute.xlu0 %1896
      %v1903 = vunpack.c.l.b16 %v1881
      %v1904 = vunpack.c.h.b16 %v1881
      %v1905 = vunpack.c.l.b16 %v1882
      %v1906 = vunpack.c.h.b16 %v1882
      %v1907 = vunpack.c.l.b16 %v1883
      %v1908 = vunpack.c.h.b16 %v1883
      %v1909 = vunpack.c.l.b16 %v1884
      %v1910 = vunpack.c.h.b16 %v1884
      %v1911 = vpack.c.b16 %v1907, %v1903
      %v1912 = vpack.c.b16 %v1908, %v1904
      %v1913 = vpack.c.b16 %v1909, %v1905
      %v1914 = vpack.c.b16 %v1910, %v1906
      %1919 = vrot.lane.b32.xlu0 %v1823, 124
      %v1920 = vpop.permute.xlu0 %1919
      %1921 = vrot.lane.b32.xlu0 %v1825, 124
      %v1922 = vpop.permute.xlu0 %1921
      %1923 = vrot.lane.b32.xlu0 %v1827, 124
      %v1924 = vpop.permute.xlu0 %1923
      %1925 = vrot.lane.b32.xlu0 %v1829, 124
      %v1926 = vpop.permute.xlu0 %1925
      %1927 = vrot.lane.b32.xlu0 %v1831, 124
      %v1928 = vpop.permute.xlu0 %1927
      %1929 = vrot.lane.b32.xlu0 %v1833, 124
      %v1930 = vpop.permute.xlu0 %1929
      %1931 = vrot.lane.b32.xlu0 %v1835, 124
      %v1932 = vpop.permute.xlu0 %1931
      %1933 = vrot.lane.b32.xlu0 %v1837, 124
      %v1934 = vpop.permute.xlu0 %1933
      %1935 = vrot.lane.b32.xlu0 %v1839, 124
      %v1936 = vpop.permute.xlu0 %1935
      %1937 = vrot.lane.b32.xlu0 %v1841, 124
      %v1938 = vpop.permute.xlu0 %1937
      %1939 = vrot.lane.b32.xlu0 %v1843, 124
      %v1940 = vpop.permute.xlu0 %1939
      %1941 = vrot.lane.b32.xlu0 %v1845, 124
      %v1942 = vpop.permute.xlu0 %1941
      %1943 = vrot.lane.b32.xlu0 %v1847, 124
      %v1944 = vpop.permute.xlu0 %1943
      %1945 = vrot.lane.b32.xlu0 %v1849, 124
      %v1946 = vpop.permute.xlu0 %1945
      %1947 = vrot.lane.b32.xlu0 %v1851, 124
      %v1948 = vpop.permute.xlu0 %1947
      %1949 = vrot.lane.b32.xlu0 %v1853, 124
      %v1950 = vpop.permute.xlu0 %1949
      %1951 = vrot.lane.b32.xlu0 %v1855, 124
      %v1952 = vpop.permute.xlu0 %1951
      %1953 = vrot.lane.b32.xlu0 %v1857, 124
      %v1954 = vpop.permute.xlu0 %1953
      %1955 = vrot.lane.b32.xlu0 %v1859, 124
      %v1956 = vpop.permute.xlu0 %1955
      %1957 = vrot.lane.b32.xlu0 %v1861, 124
      %v1958 = vpop.permute.xlu0 %1957
      %1959 = vrot.lane.b32.xlu0 %v1863, 124
      %v1960 = vpop.permute.xlu0 %1959
      %1961 = vrot.lane.b32.xlu0 %v1865, 124
      %v1962 = vpop.permute.xlu0 %1961
      %1963 = vrot.lane.b32.xlu0 %v1867, 124
      %v1964 = vpop.permute.xlu0 %1963
      %1965 = vrot.lane.b32.xlu0 %v1869, 124
      %v1966 = vpop.permute.xlu0 %1965
      %1967 = vrot.lane.b32.xlu0 %v1871, 124
      %v1968 = vpop.permute.xlu0 %1967
      %1969 = vrot.lane.b32.xlu0 %v1873, 124
      %v1970 = vpop.permute.xlu0 %1969
      %1971 = vrot.lane.b32.xlu0 %v1875, 124
      %v1972 = vpop.permute.xlu0 %1971
      %1973 = vrot.lane.b32.xlu0 %v1877, 124
      %v1974 = vpop.permute.xlu0 %1973
      %2007 = vmatprep.subr.bf16.mxu0 0
      %2008 = vmatpush1.bf16.msra.mxu0 %v1926
      %2009 = vmatprep.subr.bf16.mxu0 0
      %2010 = vmatpush1.bf16.msra.mxu0 %v1924
      %2011 = vmatprep.subr.bf16.mxu0 0
      %2012 = vmatpush1.bf16.msra.mxu0 %v1922
      %2013 = vmatprep.subr.bf16.mxu0 0
      %2014 = vmatpush1.bf16.msra.mxu0 %v1920
      %2015 = vmatprep.subr.bf16.mxu0 0
      %2016 = vmatpush1.bf16.msra.mxu0 %v1837
      %2017 = vmatprep.subr.bf16.mxu0 0
      %2018 = vmatpush1.bf16.msra.mxu0 %v1835
      %2019 = vmatprep.subr.bf16.mxu0 0
      %2020 = vmatpush1.bf16.msra.mxu0 %v1833
      %2021 = vmatprep.subr.bf16.mxu0 0
      %2022 = vmatpush1.bf16.msra.mxu0 %v1831
      %2023 = vmatprep.subr.bf16.mxu0 0
      %2024 = vmatpush2.bf16.msra.mxu0 %v1942
      %2025 = vmatprep.subr.bf16.mxu0 0
      %2026 = vmatpush2.bf16.msra.mxu0 %v1940
      %2027 = vmatprep.subr.bf16.mxu0 0
      %2028 = vmatpush2.bf16.msra.mxu0 %v1938
      %2029 = vmatprep.subr.bf16.mxu0 0
      %2030 = vmatpush2.bf16.msra.mxu0 %v1936
      %2031 = vmatprep.subr.bf16.mxu0 0
      %2032 = vmatpush2.bf16.msra.mxu0 %v1934
      %2033 = vmatprep.subr.bf16.mxu0 0
      %2034 = vmatpush2.bf16.msra.mxu0 %v1932
      %2035 = vmatprep.subr.bf16.mxu0 0
      %2036 = vmatpush2.bf16.msra.mxu0 %v1930
      %2037 = vmatprep.subr.bf16.mxu0 0
      %2038 = vmatpush2.bf16.msra.mxu0 %v1928
      %2039 = vmatprep.mubr.bf16.mxu0 %v1912
      %2040 = vmatmul.mubr.bf16.gmra.mxu0 %v1911
      %v2041 = vpop.f32.mrf.mxu0
      %v2042 = vadd.f32 %v1892, %v2041
      %v2043 = vpop.f32.mrf.mxu0
      %v2044 = vpop.f32.mrf.mxu0
      %v2045 = vadd.f32 %v1897, %v2044
      %v2046 = vpop.f32.mrf.mxu0
      %2047 = vdwg.mxu0
      %2048 = vmatprep.subr.bf16.mxu0 0
      %2049 = vmatpush1.bf16.msra.mxu0 %v1958
      %2050 = vmatprep.subr.bf16.mxu0 0
      %2051 = vmatpush1.bf16.msra.mxu0 %v1956
      %2052 = vmatprep.subr.bf16.mxu0 0
      %2053 = vmatpush1.bf16.msra.mxu0 %v1954
      %2054 = vmatprep.subr.bf16.mxu0 0
      %2055 = vmatpush1.bf16.msra.mxu0 %v1952
      %2056 = vmatprep.subr.bf16.mxu0 0
      %2057 = vmatpush1.bf16.msra.mxu0 %v1950
      %2058 = vmatprep.subr.bf16.mxu0 0
      %2059 = vmatpush1.bf16.msra.mxu0 %v1948
      %2060 = vmatprep.subr.bf16.mxu0 0
      %2061 = vmatpush1.bf16.msra.mxu0 %v1946
      %2062 = vmatprep.subr.bf16.mxu0 0
      %2063 = vmatpush1.bf16.msra.mxu0 %v1944
      %2064 = vmatprep.subr.bf16.mxu0 0
      %2065 = vmatpush2.bf16.msra.mxu0 %v1974
      %2066 = vmatprep.subr.bf16.mxu0 0
      %2067 = vmatpush2.bf16.msra.mxu0 %v1972
      %2068 = vmatprep.subr.bf16.mxu0 0
      %2069 = vmatpush2.bf16.msra.mxu0 %v1970
      %2070 = vmatprep.subr.bf16.mxu0 0
      %2071 = vmatpush2.bf16.msra.mxu0 %v1968
      %2072 = vmatprep.subr.bf16.mxu0 0
      %2073 = vmatpush2.bf16.msra.mxu0 %v1966
      %2074 = vmatprep.subr.bf16.mxu0 0
      %2075 = vmatpush2.bf16.msra.mxu0 %v1964
      %2076 = vmatprep.subr.bf16.mxu0 0
      %2077 = vmatpush2.bf16.msra.mxu0 %v1962
      %2078 = vmatprep.subr.bf16.mxu0 0
      %2079 = vmatpush2.bf16.msra.mxu0 %v1960
      %2080 = vmatprep.mubr.bf16.mxu0 %v1914
      %2081 = vmatmul.mubr.bf16.gmra.mxu0 %v1913
      %v2082 = vpop.f32.mrf.mxu0
      %v2083 = vadd.f32 %v2042, %v2082
      %v2084 = vpop.f32.mrf.mxu0
      %v2085 = vpop.f32.mrf.mxu0
      %v2086 = vadd.f32 %v2045, %v2085
      %v2087 = vpop.f32.mrf.mxu0
      %2088 = vdwg.mxu0
      %v2089 = vmax.f32 %v2083, 0.0
      %v2090 = vmax.f32 %v2086, 0.0
      %s2091 = scalar_lea.vmem [#allocation4], %s1885
      %2092 = vst.msk [vmem:[%s2091] sm:$0xff] %vm223, %v2089
      %2093 = vst.msk [vmem:[%s2091 + $0x8] sm:$0xff] %vm223, %v2090
    $region46: #{calanet_forward.1} parent=1 // loop_footer
      %s1376 = sadd.s32 1, %s1372
    $region47: #{calanet_forward.1} parent=1 // loop_footer_branch
      %1371 = sbr.rel target = $region43
    $region48: #{calanet_forward.1} parent=1 // loop_exit
      _
    %v2094 = vld [vmem:[#allocation4] sm:$0xff]
    %v2095 = vld [vmem:[#allocation4 + $0x8] sm:$0xff]
    %v2096 = vld [vmem:[#allocation4 + $0x10] sm:$0xff]
    %v2097 = vld [vmem:[#allocation4 + $0x18] sm:$0xff]
    %v2098 = vld [vmem:[#allocation4 + $0x20] sm:$0xff]
    %v2099 = vld [vmem:[#allocation4 + $0x28] sm:$0xff]
    %v2100 = vld [vmem:[#allocation4 + $0x30] sm:$0xff]
    %v2101 = vld [vmem:[#allocation4 + $0x38] sm:$0xff]
    %v2102 = vpack.c.bf16 %v2095, %v2094
    %v2103 = vpack.c.bf16 %v2097, %v2096
    %v2104 = vpack.c.bf16 %v2099, %v2098
    %v2105 = vpack.c.bf16 %v2101, %v2100
    %v2106 = vld [vmem:[#allocation5] sm:$0x7]
    %v2107 = vld [vmem:[%s8] sm:$0x3f]
    %2109 = vset.pattern.permute.xlu0 0
    %2110 = vperm.xlu0 %2109, %v2107
    %v2111 = vpop.permute.xlu0 %2110
    %vm2113 = vcmask 523264
    %v2115 = vsel %vm2113, %v2106, 0
    %2117 = vmatprep.subr.bf16.mxu0 0
    %2118 = vmatpush1.bf16.msra.mxu0 0
    %2119 = vmatprep.subr.bf16.mxu0 0
    %2120 = vmatpush1.bf16.msra.mxu0 0
    %2121 = vmatprep.subr.bf16.mxu0 0
    %2122 = vmatpush1.bf16.msra.mxu0 0
    %2123 = vmatprep.subr.bf16.mxu0 0
    %2124 = vmatpush1.bf16.msra.mxu0 0
    %2125 = vmatprep.subr.bf16.mxu0 0
    %2126 = vmatpush1.bf16.msra.mxu0 %v2105
    %2127 = vmatprep.subr.bf16.mxu0 0
    %2128 = vmatpush1.bf16.msra.mxu0 %v2104
    %2129 = vmatprep.subr.bf16.mxu0 0
    %2130 = vmatpush1.bf16.msra.mxu0 %v2103
    %2131 = vmatprep.subr.bf16.mxu0 0
    %2132 = vmatpush1.bf16.msra.mxu0 %v2102
    %2133 = vmatprep.subr.bf16.mxu0 0
    %2134 = vmatpush2.bf16.msra.mxu0 0
    %2135 = vmatprep.subr.bf16.mxu0 0
    %2136 = vmatpush2.bf16.msra.mxu0 0
    %2137 = vmatprep.subr.bf16.mxu0 0
    %2138 = vmatpush2.bf16.msra.mxu0 0
    %2139 = vmatprep.subr.bf16.mxu0 0
    %2140 = vmatpush2.bf16.msra.mxu0 0
    %2141 = vmatprep.subr.bf16.mxu0 0
    %2142 = vmatpush2.bf16.msra.mxu0 0
    %2143 = vmatprep.subr.bf16.mxu0 0
    %2144 = vmatpush2.bf16.msra.mxu0 0
    %2145 = vmatprep.subr.bf16.mxu0 0
    %2146 = vmatpush2.bf16.msra.mxu0 0
    %2147 = vmatprep.subr.bf16.mxu0 0
    %2148 = vmatpush2.bf16.msra.mxu0 0
    %2149 = vmatprep.mubr.bf16.mxu0 0
    %2150 = vmatmul.mubr.bf16.gmra.mxu0 %v2115
    %v2151 = vpop.f32.mrf.mxu0
    %v2152 = vadd.f32 %v2111, %v2151
    %v2153 = vpop.f32.mrf.mxu0
    %v2154 = vpop.f32.mrf.mxu0
    %v2155 = vpop.f32.mrf.mxu0
    %2156 = vdwg.mxu0
    %vm2157 = vcmask 13312
    %v2158 = vsel %vm2157, %v2152, -inf
    %v2159 = vrot.slane %v2158, 4
    %v2160 = vmax.f32 %v2158, %v2159
    %v2161 = vrot.slane %v2160, 2
    %v2162 = vmax.f32 %v2160, %v2161
    %v2163 = vrot.slane %v2162, 1
    %v2164 = vmax.f32 %v2162, %v2163
    %v2165 = vsub.f32 %v2152, %v2164
    %v2166 = vmul.f32 %v2165, 1.442695
    %v2167 = vpow.pop %v2166
    %v2168 = vsel %vm2157, %v2167, 0.0
    %v2169 = vrot.slane %v2168, 4
    %v2170 = vadd.f32 %v2168, %v2169
    %v2171 = vrot.slane %v2170, 2
    %v2172 = vadd.f32 %v2170, %v2171
    %v2173 = vrot.slane %v2172, 1
    %v2174 = vadd.f32 %v2172, %v2173
    %v2175 = vlog2.pop %v2174
    %v2176 = vmul.f32 %v2175, 0.6931472
    %v2177 = vadd.f32 %v2164, %v2176
    %v2178 = vsub.f32 %v2152, %v2177
    %2179 = vst.msk [vmem:[%s9] sm:$0x3f] %vm2157, %v2178
    // Predicated region
    $region49: #{calanet_forward.1} parent=1 // pred_check
      _
    $region50: #{calanet_forward.1} parent=1 // pred_check_branch
      %2181 = sbr.rel (0) target = $region52
    $region51: #{calanet_forward.1} parent=1 // pred_region
      _
    $region52: #{calanet_forward.1} parent=1 // pred_fallthru
      _
    // Predicated region
    $region53: #{calanet_forward.1} parent=1 // pred_check
      _
    $region54: #{calanet_forward.1} parent=1 // pred_check_branch
      %2183 = sbr.rel (0) target = $region56
    $region55: #{calanet_forward.1} parent=1 // pred_region
      _
    $region56: #{calanet_forward.1} parent=1 // pred_fallthru
      _
    %2184 = vsyncpa [#allocation6], 1

</llo_original>
